<compile_context>
chip_gen: v5e
topology: v5e:2x2
jax: 0.10.0
libtpu: 0.0.40
codegen_flags: <defaults>
</compile_context>

<pallas_src>
import numpy as np
import jax
import jax.numpy as jnp
from jax.experimental import pallas as pl
from jax.experimental.pallas import tpu as pltpu

# ----------------------------- configuration -------------------------------
INPUT_DIM = 16
CAT_IDXS = [1, 5, 9, 13]          # categorical column positions
CAT_DIMS = [7, 11, 5, 13]         # number of modalities per categorical feature
CAT_EMB_DIMS = [3, 2, 4, 3]       # embedding dim per categorical feature

BATCH = 256
TILE_B = 128                      # 2 tiles -> both v7x TCs busy, only 2 grid steps

# The PyTorch module sorts categorical metadata by column index (argsort(cat_idxs)).
_order = sorted(range(len(CAT_IDXS)), key=lambda i: CAT_IDXS[i])
SORTED_CAT_IDXS = [CAT_IDXS[i] for i in _order]
SORTED_CAT_DIMS = [CAT_DIMS[i] for i in _order]
SORTED_EMB_DIMS = [CAT_EMB_DIMS[i] for i in _order]
N_CAT = len(SORTED_CAT_IDXS)
POST_DIM = INPUT_DIM + sum(SORTED_EMB_DIMS) - N_CAT   # post_embed_dim (= 24)

MAX_CAT = 16                       # pad every table to 16 rows (8-aligned ref slices)
assert MAX_CAT >= max(SORTED_CAT_DIMS)
TAB_ROWS = N_CAT * MAX_CAT                            # 64 stacked table rows
W_ROWS = INPUT_DIM + TAB_ROWS                         # 80 slab rows
OUT_PAD = ((POST_DIM + 127) // 128) * 128             # 128: lane-dense output width


def _column_layout():
    """Per input column: ('cont', out_offset, None) or ('cat', out_offset, slot)."""
    cat_slot_of = {c: s for s, c in enumerate(SORTED_CAT_IDXS)}
    layout, off = [], 0
    for j in range(INPUT_DIM):
        if j in cat_slot_of:
            s = cat_slot_of[j]
            layout.append(("cat", off, s))
            off += SORTED_EMB_DIMS[s]
        else:
            layout.append(("cont", off, None))
            off += 1
    assert off == POST_DIM
    return layout


LAYOUT = _column_layout()


# -------------------------------- kernel -----------------------------------
def embedding_kernel(x_ref, w_ref, out_ref):
    x = x_ref[...]                                        # (TILE_B, INPUT_DIM) f32
    tb = x.shape[0]

    # Combined one-hot over the stacked table rows: slot s owns lanes
    # [s*MAX_CAT, (s+1)*MAX_CAT); its target lane is id_s + s*MAX_CAT. Category
    # ids are exact small integers carried in f32, so the compare is exact.
    lane_f = jax.lax.broadcasted_iota(jnp.int32, (tb, TAB_ROWS), 1).astype(jnp.float32)
    hits = None
    for slot, col in enumerate(SORTED_CAT_IDXS):
        target = x[:, col:col + 1] + jnp.float32(slot * MAX_CAT)   # (TILE_B, 1)
        eq = lane_f == target
        hits = eq if hits is None else jnp.logical_or(hits, eq)
    onehot_all = hits.astype(jnp.float32)                 # (TILE_B, TAB_ROWS)

    # Two MXU pushes per batch tile:
    #   continuous scatter:  x @ S          (categorical cols hit zero rows of S)
    #   all embeddings:      onehot_all @ T (tables pre-placed at output offsets)
    s_mat = w_ref[0:INPUT_DIM, :]                         # (INPUT_DIM, OUT_PAD)
    t_mat = w_ref[INPUT_DIM:W_ROWS, :]                    # (TAB_ROWS, OUT_PAD)
    acc = jnp.dot(x, s_mat, preferred_element_type=jnp.float32,
                  precision=jax.lax.Precision.HIGHEST)
    acc = acc + jnp.dot(onehot_all, t_mat, preferred_element_type=jnp.float32,
                        precision=jax.lax.Precision.HIGHEST)
    out_ref[...] = acc                                    # full-lane (128-wide) store


def embedding_generator_pallas(x, w_slab):
    if N_CAT == 0:                 # skip_embedding path of the PyTorch module
        return x.astype(jnp.float32)
    batch = x.shape[0]
    assert batch % TILE_B == 0, "demo uses a batch divisible by TILE_B"
    out_padded = pl.pallas_call(
        embedding_kernel,
        grid=(batch // TILE_B,),
        in_specs=[
            pl.BlockSpec((TILE_B, INPUT_DIM), lambda i: (i, 0)),   # batch-tiled x
            pl.BlockSpec((W_ROWS, OUT_PAD), lambda i: (0, 0)),     # resident weights
        ],
        out_specs=pl.BlockSpec((TILE_B, OUT_PAD), lambda i: (i, 0)),
        out_shape=jax.ShapeDtypeStruct((batch, OUT_PAD), jnp.float32),
        compiler_params=pltpu.CompilerParams(
            dimension_semantics=("parallel",)),                    # v7x: 2 TCs
    )(x, w_slab)
    # Slice the lane padding back off to match the module's output shape.
    return out_padded[:, :POST_DIM]


# ---------------------------- parameter build --------------------------------
def make_embedding_tables(key):
    # torch.nn.Embedding default init: weight ~ N(0, 1)
    keys = jax.random.split(key, N_CAT)
    return [jax.random.normal(k, (dim, edim), jnp.float32)
            for k, dim, edim in zip(keys, SORTED_CAT_DIMS, SORTED_EMB_DIMS)]


def build_weight_slab(tables):
    """One lane-packed slab (W_ROWS, OUT_PAD):
       rows [0, INPUT_DIM): scatter matrix S (continuous cols -> output offsets)
       rows [INPUT_DIM + s*MAX_CAT, ...): table s, zero-padded to MAX_CAT rows,
       pre-placed at its output column offset; columns >= POST_DIM are zero pad."""
    slab = np.zeros((W_ROWS, OUT_PAD), np.float32)
    for j, (kind, off, slot) in enumerate(LAYOUT):
        if kind == "cont":
            slab[j, off] = 1.0
        else:
            dim, edim = SORTED_CAT_DIMS[slot], SORTED_EMB_DIMS[slot]
            r0 = INPUT_DIM + slot * MAX_CAT
            slab[r0:r0 + dim, off:off + edim] = np.asarray(tables[slot])
    return jnp.asarray(slab)


# ------------------------- pure-JAX reference --------------------------------
def embedding_generator_ref(x, tables):
    """Mirrors EmbeddingGenerator.forward: column-by-column concat."""
    cols = []
    for j, (kind, off, slot) in enumerate(LAYOUT):
        if kind == "cont":
            cols.append(x[:, j:j + 1])
        else:
            idx = x[:, j].astype(jnp.int32)
            cols.append(jnp.take(tables[slot], idx, axis=0))
    return jnp.concatenate(cols, axis=1)


# ---------------------------------- main ------------------------------------
if __name__ == "__main__":
    key = jax.random.PRNGKey(0)
    k_cont, k_cat, k_emb = jax.random.split(key, 3)

    # continuous features ~ N(0,1); categorical columns hold integer category ids
    x = jax.random.normal(k_cont, (BATCH, INPUT_DIM), jnp.float32)
    cat_keys = jax.random.split(k_cat, N_CAT)
    for k, col, dim in zip(cat_keys, SORTED_CAT_IDXS, SORTED_CAT_DIMS):
        ids = jax.random.randint(k, (BATCH,), 0, dim)
        x = x.at[:, col].set(ids.astype(jnp.float32))

    tables = make_embedding_tables(k_emb)
    w_slab = build_weight_slab(tables)

    out = embedding_generator_pallas(x, w_slab)
    out = jax.block_until_ready(out)

    ref = embedding_generator_ref(x, tables)

    assert out.shape == (BATCH, POST_DIM)
    assert bool(jnp.all(jnp.isfinite(out)))
    assert bool(jnp.allclose(out, ref, rtol=1e-5, atol=1e-5))
    print("KERNEL_OK")
</pallas_src>

<mosaic_0001>
module attributes {stable_mosaic.version = 11 : i64} {
  func.func @embedding_kernel(%arg0: i32, %arg1: memref<128x16xf32, #tpu.memory_space<vmem>>, %arg2: memref<80x128xf32, #tpu.memory_space<vmem>>, %arg3: memref<128x128xf32, #tpu.memory_space<vmem>>) attributes {dimension_semantics = [#tpu.dimension_semantics<parallel>], iteration_bounds = array<i64: 2>, scalar_prefetch = 0 : i64, scratch_operands = 0 : i64, tpu.core_type = #tpu.core_type<tc>, window_params = [{transform_indices = @transform_0, window_bounds = array<i64: 128, 16>}, {pipeline_mode = #tpu.pipeline_mode<synchronous>, transform_indices = @transform_1, window_bounds = array<i64: 80, 128>}, {transform_indices = @transform_2, window_bounds = array<i64: 128, 128>}]} {
    %c0 = arith.constant 0 : index
    %c0_0 = arith.constant 0 : index
    %0 = vector.load %arg1[%c0, %c0_0] : memref<128x16xf32, #tpu.memory_space<vmem>>, vector<128x16xf32>
    %1 = tpu.iota {dimensions = array<i32: 1>} : vector<128x64xi32>
    %2 = arith.sitofp %1 : vector<128x64xi32> to vector<128x64xf32>
    %3 = vector.extract_strided_slice %0 {offsets = [0, 1], sizes = [128, 1], strides = [1, 1]} : vector<128x16xf32> to vector<128x1xf32>
    %cst = arith.constant 0.000000e+00 : f32
    %4 = vector.broadcast %cst : f32 to vector<128x1xf32>
    %5 = arith.addf %3, %4 : vector<128x1xf32>
    %6 = vector.broadcast %5 : vector<128x1xf32> to vector<128x64xf32>
    %7 = arith.cmpf oeq, %2, %6 : vector<128x64xf32>
    %8 = vector.extract_strided_slice %0 {offsets = [0, 5], sizes = [128, 1], strides = [1, 1]} : vector<128x16xf32> to vector<128x1xf32>
    %cst_1 = arith.constant 1.600000e+01 : f32
    %9 = vector.broadcast %cst_1 : f32 to vector<128x1xf32>
    %10 = arith.addf %8, %9 : vector<128x1xf32>
    %11 = vector.broadcast %10 : vector<128x1xf32> to vector<128x64xf32>
    %12 = arith.cmpf oeq, %2, %11 : vector<128x64xf32>
    %13 = arith.ori %7, %12 : vector<128x64xi1>
    %14 = vector.extract_strided_slice %0 {offsets = [0, 9], sizes = [128, 1], strides = [1, 1]} : vector<128x16xf32> to vector<128x1xf32>
    %cst_2 = arith.constant 3.200000e+01 : f32
    %15 = vector.broadcast %cst_2 : f32 to vector<128x1xf32>
    %16 = arith.addf %14, %15 : vector<128x1xf32>
    %17 = vector.broadcast %16 : vector<128x1xf32> to vector<128x64xf32>
    %18 = arith.cmpf oeq, %2, %17 : vector<128x64xf32>
    %19 = arith.ori %13, %18 : vector<128x64xi1>
    %20 = vector.extract_strided_slice %0 {offsets = [0, 13], sizes = [128, 1], strides = [1, 1]} : vector<128x16xf32> to vector<128x1xf32>
    %cst_3 = arith.constant 4.800000e+01 : f32
    %21 = vector.broadcast %cst_3 : f32 to vector<128x1xf32>
    %22 = arith.addf %20, %21 : vector<128x1xf32>
    %23 = vector.broadcast %22 : vector<128x1xf32> to vector<128x64xf32>
    %24 = arith.cmpf oeq, %2, %23 : vector<128x64xf32>
    %25 = arith.ori %19, %24 : vector<128x64xi1>
    %26 = arith.extui %25 : vector<128x64xi1> to vector<128x64xi32>
    %27 = arith.sitofp %26 : vector<128x64xi32> to vector<128x64xf32>
    %c0_4 = arith.constant 0 : index
    %c0_5 = arith.constant 0 : index
    %28 = vector.load %arg2[%c0_4, %c0_5] : memref<80x128xf32, #tpu.memory_space<vmem>>, vector<16x128xf32>
    %c16 = arith.constant 16 : index
    %c0_6 = arith.constant 0 : index
    %29 = vector.load %arg2[%c16, %c0_6] : memref<80x128xf32, #tpu.memory_space<vmem>>, vector<64x128xf32>
    %cst_7 = arith.constant dense<0.000000e+00> : vector<128x128xf32>
    %30 = tpu.matmul %0, %28, %cst_7 {dimension_numbers = #tpu.dot_dimension_numbers<[1], [0], [0], [1], [0, 0, 1, 1], [], []>, precision = #tpu.contract_precision<fp32>} : vector<128x16xf32>, vector<16x128xf32>, vector<128x128xf32> -> vector<128x128xf32>
    %cst_8 = arith.constant dense<0.000000e+00> : vector<128x128xf32>
    %31 = tpu.matmul %27, %29, %cst_8 {dimension_numbers = #tpu.dot_dimension_numbers<[1], [0], [0], [1], [0, 0, 1, 1], [], []>, precision = #tpu.contract_precision<fp32>} : vector<128x64xf32>, vector<64x128xf32>, vector<128x128xf32> -> vector<128x128xf32>
    %32 = arith.addf %30, %31 : vector<128x128xf32>
    %c0_9 = arith.constant 0 : index
    %c0_10 = arith.constant 0 : index
    %33 = vector.load %arg3[%c0_9, %c0_10] : memref<128x128xf32, #tpu.memory_space<vmem>>, vector<128x128xf32>
    tpu.vector_store %arg3[%c0_9, %c0_10], %32 {strides = array<i32>} : memref<128x128xf32, #tpu.memory_space<vmem>>, vector<128x128xf32>,
    return
  }
  func.func @transform_0(%arg0: i32) -> (i32, i32) {
    %c0_i32 = arith.constant 0 : i32
    %c0_i32_0 = arith.constant 0 : i32
    return %arg0, %c0_i32 : i32, i32
  }
  func.func @transform_1(%arg0: i32) -> (i32, i32) {
    %c0_i32 = arith.constant 0 : i32
    %c0_i32_0 = arith.constant 0 : i32
    %c0_i32_1 = arith.constant 0 : i32
    return %c0_i32, %c0_i32_0 : i32, i32
  }
  func.func @transform_2(%arg0: i32) -> (i32, i32) {
    %c0_i32 = arith.constant 0 : i32
    %c0_i32_0 = arith.constant 0 : i32
    return %arg0, %c0_i32 : i32, i32
  }
}

</mosaic_0001>

<llo_original>
// kernel: tpu_custom_call.1
$region0: #{tpu_custom_call.1}
  #allocation0 [shape = 'u32[]', space=smem, size = 0x4, offset = 0x4, fixed_abs, tag = 'smem constant byte address 0x4 - core index']
  #allocation1 [shape = 'u32[72,128]{1,0:T(1,128)}', space=vmem, size = 0x9000, scoped, tag = 'internal scratch']
  %s0 = inlined_call_operand.vmem [shape: f32[256,16], index: 0, kind: input, shape index: {}]
  %s1 = inlined_call_operand.vmem [shape: f32[80,128], index: 1, kind: input, shape index: {}]
  %s2 = inlined_call_operand.hbm [shape: f32[256,128], index: 2, kind: output, shape index: {}]
  %s3 = sld [smem:[#allocation0]]
  $region41: #{tpu_custom_call.1} parent=0
    _
  %s5 = ssub.s32 1, %s3
  %s6 = scalar_select 0, %s5, %s3
  $region1: #{tpu_custom_call.1} parent=0
    #allocation2 [shape = 'u8[131072]{0}', space=vmem, size = 0x20000, scoped, tag = 'output window, operand 0']
    #allocation3 [shape = 's32[2]{0}', space=sflag, size = 0x8, scoped, tag = 'scoped memory for tpu_custom_call.1']
    %7 = vsyncpa [#allocation3], 0
    %s8 = scalar_lea.sflag [#allocation3], 1
    %9 = vsyncpa %s8, 0
    loop: start=0, step=1, limit=4
    $region2: #{tpu_custom_call.1} parent=1 // loop_pre_header
      _
    $region3: #{tpu_custom_call.1} parent=1 // loop_header
      %s11 = sphi 0, %s15
      %p12 = scmp.ge.s32.totalorder %s11, 4
      %s21 = sphi 0, %s23
      %s24 = sphi 0, %s21
      %s25 = sphi 0, %s24
      %s41 = sphi 0, %s25
      %s45 = sphi 0, %s45
      %s47 = sphi 0, %s45
      %s48 = sphi 0, %s47
      %s62 = sphi 0, %s48
      %s68 = sphi 0, %s70
      %s71 = sphi 0, %s68
      %s72 = sphi 0, %s71
      %s88 = sphi 0, %s72
    $region4: #{tpu_custom_call.1} parent=1 // loop_header_branch
      %14 = sbr.rel (%p12) target = $region8
    $region5: #{tpu_custom_call.1} parent=1 // loop_body
      %s16 = ssub.s32 %s11, 1
      %s17 = ssub.s32 %s11, 2
      %s18 = sadd.s32 %s11, 1
      %s19 = ssub.s32 %s11, %s18
      %p20 = scmp.eq.s32.totalorder %s19, 0
      %s22 = sadd.s32 %s21, 1
      %s23 = scalar_select %p20, %s21, %s22
      %p26 = pneg %p20
      %p27 = scmp.eq.s32.totalorder %s11, 1
      %p28 = por %p26, %p27
      %p29 = scmp.ne.s32.totalorder %s21, %s24
      %p30 = scmp.eq.s32.totalorder %s11, 0
      %p31 = por %p29, %p30
      %p32 = scmp.ne.s32.totalorder %s21, %s24
      %p33 = scmp.eq.s32.totalorder %s16, 1
      %p34 = por %p32, %p33
      %p35 = scmp.ne.s32.totalorder %s24, %s25
      %p36 = scmp.eq.s32.totalorder %s16, 0
      %p37 = por %p35, %p36
      %p38 = scmp.ne.s32.totalorder %s24, %s25
      %p39 = scmp.eq.s32.totalorder %s17, 1
      %p40 = por %p38, %p39
      %p42 = scmp.ne.s32.totalorder %s25, %s41
      %p43 = scmp.eq.s32.totalorder %s17, 0
      %p44 = por %p42, %p43
      %s46 = sadd.s32 %s45, 1
      %p49 = scmp.eq.s32.totalorder %s11, 1
      %p50 = scmp.ne.s32.totalorder %s45, %s47
      %p51 = scmp.eq.s32.totalorder %s11, 0
      %p52 = por %p50, %p51
      %p53 = scmp.ne.s32.totalorder %s45, %s47
      %p54 = scmp.eq.s32.totalorder %s16, 1
      %p55 = por %p53, %p54
      %p56 = scmp.ne.s32.totalorder %s47, %s48
      %p57 = scmp.eq.s32.totalorder %s16, 0
      %p58 = por %p56, %p57
      %p59 = scmp.ne.s32.totalorder %s47, %s48
      %p60 = scmp.eq.s32.totalorder %s17, 1
      %p61 = por %p59, %p60
      %p63 = scmp.ne.s32.totalorder %s48, %s62
      %p64 = scmp.eq.s32.totalorder %s17, 0
      %p65 = por %p63, %p64
      %s66 = ssub.s32 %s11, %s18
      %p67 = scmp.eq.s32.totalorder %s66, 0
      %s69 = sadd.s32 %s68, 1
      %s70 = scalar_select %p67, %s68, %s69
      %p73 = pneg %p67
      %p74 = scmp.eq.s32.totalorder %s11, 1
      %p75 = por %p73, %p74
      %p76 = scmp.ne.s32.totalorder %s68, %s71
      %p77 = scmp.eq.s32.totalorder %s11, 0
      %p78 = por %p76, %p77
      %p79 = scmp.ne.s32.totalorder %s68, %s71
      %p80 = scmp.eq.s32.totalorder %s16, 1
      %p81 = por %p79, %p80
      %p82 = scmp.ne.s32.totalorder %s71, %s72
      %p83 = scmp.eq.s32.totalorder %s16, 0
      %p84 = por %p82, %p83
      %p85 = scmp.ne.s32.totalorder %s71, %s72
      %p86 = scmp.eq.s32.totalorder %s17, 1
      %p87 = por %p85, %p86
      %p89 = scmp.ne.s32.totalorder %s72, %s88
      %p90 = scmp.eq.s32.totalorder %s17, 0
      %p91 = por %p89, %p90
      %p92 = scmp.le.s32.totalorder 1, %s11
      %p93 = scmp.lt.s32.totalorder %s11, 3
      %p94 = pnand %p92, %p93
      %p95 = pneg %p94
      // Predicated region
      $region9: #{tpu_custom_call.1} parent=5 // pred_check
        _
      $region10: #{tpu_custom_call.1} parent=5 // pred_check_branch
        %97 = sbr.rel (%p94) target = $region12
      $region11: #{tpu_custom_call.1} parent=5 // pred_region
        %s98 = ssub.s32 %s11, 1
        // Predicated region
        $region13: #{tpu_custom_call.1} parent=11 // pred_check
          %p99 = pneg %p58
        $region14: #{tpu_custom_call.1} parent=11 // pred_check_branch
          %101 = sbr.rel (%p99) target = $region16
        $region15: #{tpu_custom_call.1} parent=11 // pred_region
          _
        $region16: #{tpu_custom_call.1} parent=11 // pred_fallthru
          _
      $region12: #{tpu_custom_call.1} parent=5 // pred_fallthru
        _
      %p102 = scmp.lt.s32.totalorder %s11, 2
      // Predicated region
      $region17: #{tpu_custom_call.1} parent=5 // pred_check
        %p103 = pneg %p102
      $region18: #{tpu_custom_call.1} parent=5 // pred_check_branch
        %105 = sbr.rel (%p103) target = $region20
      $region19: #{tpu_custom_call.1} parent=5 // pred_region
        // Predicated region
        $region21: #{tpu_custom_call.1} parent=19 // pred_check
          %p106 = pneg %p31
        $region22: #{tpu_custom_call.1} parent=19 // pred_check_branch
          %108 = sbr.rel (%p106) target = $region24
        $region23: #{tpu_custom_call.1} parent=19 // pred_region
          %s109 = smul.u32 16, %s11
          %p110 = scmp.lt.s32.totalorder %s109, 31
          %s111 = scalar_select %p110, %s109, 31
          %s112 = smul.addr %s111, 8
          %s113 = scalar_lea.vmem %s0, %s112
          %s114 = smul.u32 16, %s11
        $region24: #{tpu_custom_call.1} parent=19 // pred_fallthru
          _
      $region20: #{tpu_custom_call.1} parent=5 // pred_fallthru
        _
      %p115 = scmp.le.s32.totalorder 1, %s11
      %p116 = scmp.lt.s32.totalorder %s11, 3
      %p117 = pnand %p115, %p116
      %p118 = pneg %p117
      // Predicated region
      $region25: #{tpu_custom_call.1} parent=5 // pred_check
        _
      $region26: #{tpu_custom_call.1} parent=5 // pred_check_branch
        %120 = sbr.rel (%p117) target = $region28
      $region27: #{tpu_custom_call.1} parent=5 // pred_region
        %s121 = ssub.s32 %s11, 1
        %s122 = smul.u32 16, %s16
        %p123 = scmp.lt.s32.totalorder %s122, 31
        %s124 = scalar_select %p123, %s122, 31
        %s125 = smul.addr %s124, 8
        %s126 = scalar_lea.vmem %s0, %s125
        %p127 = pneg %p37
        %p128 = pneg %p34
        %p129 = pneg %p58
        %p130 = pneg %p55
        %p131 = pneg %p84
        %p132 = pneg %p81
        %s133 = sand.u32 %s71, 1
        %s134 = scalar_lea.sflag [#allocation3], %s133
        %s135 = sand.u32 %s71, 1
        %s136 = smul.addr %s135, 128
        %s137 = scalar_lea.vmem [#allocation2], %s136
        %s138 = smul.u32 16, %s16
        %p139 = scmp.lt.s32.totalorder %s138, 31
        %s140 = scalar_select %p139, %s138, 31
        %s141 = smul.addr %s140, 8
        %s142 = scalar_lea.vmem %s0, %s141
        %s143 = smul.u32 16, %s16
        %s144 = smul.u32 16, %s16
        %v145 = vld [vmem:[%s142] sm:$0xff]
        %v146 = vld [vmem:[%s142 + $0x8] sm:$0xff]
        %v147 = vld [vmem:[%s142 + $0x10] sm:$0xff]
        %v148 = vld [vmem:[%s142 + $0x18] sm:$0xff]
        %v149 = vld [vmem:[%s142 + $0x20] sm:$0xff]
        %v150 = vld [vmem:[%s142 + $0x28] sm:$0xff]
        %v151 = vld [vmem:[%s142 + $0x30] sm:$0xff]
        %v152 = vld [vmem:[%s142 + $0x38] sm:$0xff]
        %v153 = vld [vmem:[%s142 + $0x40] sm:$0xff]
        %v154 = vld [vmem:[%s142 + $0x48] sm:$0xff]
        %v155 = vld [vmem:[%s142 + $0x50] sm:$0xff]
        %v156 = vld [vmem:[%s142 + $0x58] sm:$0xff]
        %v157 = vld [vmem:[%s142 + $0x60] sm:$0xff]
        %v158 = vld [vmem:[%s142 + $0x68] sm:$0xff]
        %v159 = vld [vmem:[%s142 + $0x70] sm:$0xff]
        %v160 = vld [vmem:[%s142 + $0x78] sm:$0xff]
        %v161 = vlaneseq
        %v162 = vand.u32 %v161, 127
        %v163 = vcvt.s32.f32 %v162
        %v164 = vadd.f32 %v145, 0.0
        %v165 = vadd.f32 %v146, 0.0
        %v166 = vadd.f32 %v147, 0.0
        %v167 = vadd.f32 %v148, 0.0
        %v168 = vadd.f32 %v149, 0.0
        %v169 = vadd.f32 %v150, 0.0
        %v170 = vadd.f32 %v151, 0.0
        %v171 = vadd.f32 %v152, 0.0
        %v172 = vadd.f32 %v153, 0.0
        %v173 = vadd.f32 %v154, 0.0
        %v174 = vadd.f32 %v155, 0.0
        %v175 = vadd.f32 %v156, 0.0
        %v176 = vadd.f32 %v157, 0.0
        %v177 = vadd.f32 %v158, 0.0
        %v178 = vadd.f32 %v159, 0.0
        %v179 = vadd.f32 %v160, 0.0
        %181 = vset.pattern.permute.xlu0 1
        %182 = vperm.xlu0 %181, %v164
        %v183 = vpop.permute.xlu0 %182
        %186 = vset.pattern.permute.xlu0 1
        %187 = vperm.xlu0 %186, %v165
        %v188 = vpop.permute.xlu0 %187
        %191 = vset.pattern.permute.xlu0 1
        %192 = vperm.xlu0 %191, %v166
        %v193 = vpop.permute.xlu0 %192
        %196 = vset.pattern.permute.xlu0 1
        %197 = vperm.xlu0 %196, %v167
        %v198 = vpop.permute.xlu0 %197
        %201 = vset.pattern.permute.xlu0 1
        %202 = vperm.xlu0 %201, %v168
        %v203 = vpop.permute.xlu0 %202
        %206 = vset.pattern.permute.xlu0 1
        %207 = vperm.xlu0 %206, %v169
        %v208 = vpop.permute.xlu0 %207
        %211 = vset.pattern.permute.xlu0 1
        %212 = vperm.xlu0 %211, %v170
        %v213 = vpop.permute.xlu0 %212
        %216 = vset.pattern.permute.xlu0 1
        %217 = vperm.xlu0 %216, %v171
        %v218 = vpop.permute.xlu0 %217
        %221 = vset.pattern.permute.xlu0 1
        %222 = vperm.xlu0 %221, %v172
        %v223 = vpop.permute.xlu0 %222
        %226 = vset.pattern.permute.xlu0 1
        %227 = vperm.xlu0 %226, %v173
        %v228 = vpop.permute.xlu0 %227
        %231 = vset.pattern.permute.xlu0 1
        %232 = vperm.xlu0 %231, %v174
        %v233 = vpop.permute.xlu0 %232
        %236 = vset.pattern.permute.xlu0 1
        %237 = vperm.xlu0 %236, %v175
        %v238 = vpop.permute.xlu0 %237
        %241 = vset.pattern.permute.xlu0 1
        %242 = vperm.xlu0 %241, %v176
        %v243 = vpop.permute.xlu0 %242
        %246 = vset.pattern.permute.xlu0 1
        %247 = vperm.xlu0 %246, %v177
        %v248 = vpop.permute.xlu0 %247
        %251 = vset.pattern.permute.xlu0 1
        %252 = vperm.xlu0 %251, %v178
        %v253 = vpop.permute.xlu0 %252
        %256 = vset.pattern.permute.xlu0 1
        %257 = vperm.xlu0 %256, %v179
        %v258 = vpop.permute.xlu0 %257
        %vm260 = vcmp.eq.f32.partialorder %v163, %v183
        %vm261 = vcmp.eq.f32.partialorder %v163, %v188
        %vm262 = vcmp.eq.f32.partialorder %v163, %v193
        %vm263 = vcmp.eq.f32.partialorder %v163, %v198
        %vm264 = vcmp.eq.f32.partialorder %v163, %v203
        %vm265 = vcmp.eq.f32.partialorder %v163, %v208
        %vm266 = vcmp.eq.f32.partialorder %v163, %v213
        %vm267 = vcmp.eq.f32.partialorder %v163, %v218
        %vm268 = vcmp.eq.f32.partialorder %v163, %v223
        %vm269 = vcmp.eq.f32.partialorder %v163, %v228
        %vm270 = vcmp.eq.f32.partialorder %v163, %v233
        %vm271 = vcmp.eq.f32.partialorder %v163, %v238
        %vm272 = vcmp.eq.f32.partialorder %v163, %v243
        %vm273 = vcmp.eq.f32.partialorder %v163, %v248
        %vm274 = vcmp.eq.f32.partialorder %v163, %v253
        %vm275 = vcmp.eq.f32.partialorder %v163, %v258
        %v276 = vadd.f32 %v145, 16.0
        %v277 = vadd.f32 %v146, 16.0
        %v278 = vadd.f32 %v147, 16.0
        %v279 = vadd.f32 %v148, 16.0
        %v280 = vadd.f32 %v149, 16.0
        %v281 = vadd.f32 %v150, 16.0
        %v282 = vadd.f32 %v151, 16.0
        %v283 = vadd.f32 %v152, 16.0
        %v284 = vadd.f32 %v153, 16.0
        %v285 = vadd.f32 %v154, 16.0
        %v286 = vadd.f32 %v155, 16.0
        %v287 = vadd.f32 %v156, 16.0
        %v288 = vadd.f32 %v157, 16.0
        %v289 = vadd.f32 %v158, 16.0
        %v290 = vadd.f32 %v159, 16.0
        %v291 = vadd.f32 %v160, 16.0
        %293 = vset.pattern.permute.xlu0 5
        %294 = vperm.xlu0 %293, %v276
        %v295 = vpop.permute.xlu0 %294
        %298 = vset.pattern.permute.xlu0 5
        %299 = vperm.xlu0 %298, %v277
        %v300 = vpop.permute.xlu0 %299
        %303 = vset.pattern.permute.xlu0 5
        %304 = vperm.xlu0 %303, %v278
        %v305 = vpop.permute.xlu0 %304
        %308 = vset.pattern.permute.xlu0 5
        %309 = vperm.xlu0 %308, %v279
        %v310 = vpop.permute.xlu0 %309
        %313 = vset.pattern.permute.xlu0 5
        %314 = vperm.xlu0 %313, %v280
        %v315 = vpop.permute.xlu0 %314
        %318 = vset.pattern.permute.xlu0 5
        %319 = vperm.xlu0 %318, %v281
        %v320 = vpop.permute.xlu0 %319
        %323 = vset.pattern.permute.xlu0 5
        %324 = vperm.xlu0 %323, %v282
        %v325 = vpop.permute.xlu0 %324
        %328 = vset.pattern.permute.xlu0 5
        %329 = vperm.xlu0 %328, %v283
        %v330 = vpop.permute.xlu0 %329
        %333 = vset.pattern.permute.xlu0 5
        %334 = vperm.xlu0 %333, %v284
        %v335 = vpop.permute.xlu0 %334
        %338 = vset.pattern.permute.xlu0 5
        %339 = vperm.xlu0 %338, %v285
        %v340 = vpop.permute.xlu0 %339
        %343 = vset.pattern.permute.xlu0 5
        %344 = vperm.xlu0 %343, %v286
        %v345 = vpop.permute.xlu0 %344
        %348 = vset.pattern.permute.xlu0 5
        %349 = vperm.xlu0 %348, %v287
        %v350 = vpop.permute.xlu0 %349
        %353 = vset.pattern.permute.xlu0 5
        %354 = vperm.xlu0 %353, %v288
        %v355 = vpop.permute.xlu0 %354
        %358 = vset.pattern.permute.xlu0 5
        %359 = vperm.xlu0 %358, %v289
        %v360 = vpop.permute.xlu0 %359
        %363 = vset.pattern.permute.xlu0 5
        %364 = vperm.xlu0 %363, %v290
        %v365 = vpop.permute.xlu0 %364
        %368 = vset.pattern.permute.xlu0 5
        %369 = vperm.xlu0 %368, %v291
        %v370 = vpop.permute.xlu0 %369
        %vm372 = vcmp.eq.f32.partialorder %v163, %v295
        %vm373 = vcmp.eq.f32.partialorder %v163, %v300
        %vm374 = vcmp.eq.f32.partialorder %v163, %v305
        %vm375 = vcmp.eq.f32.partialorder %v163, %v310
        %vm376 = vcmp.eq.f32.partialorder %v163, %v315
        %vm377 = vcmp.eq.f32.partialorder %v163, %v320
        %vm378 = vcmp.eq.f32.partialorder %v163, %v325
        %vm379 = vcmp.eq.f32.partialorder %v163, %v330
        %vm380 = vcmp.eq.f32.partialorder %v163, %v335
        %vm381 = vcmp.eq.f32.partialorder %v163, %v340
        %vm382 = vcmp.eq.f32.partialorder %v163, %v345
        %vm383 = vcmp.eq.f32.partialorder %v163, %v350
        %vm384 = vcmp.eq.f32.partialorder %v163, %v355
        %vm385 = vcmp.eq.f32.partialorder %v163, %v360
        %vm386 = vcmp.eq.f32.partialorder %v163, %v365
        %vm387 = vcmp.eq.f32.partialorder %v163, %v370
        %vm388 = vmor %vm260, %vm372
        %vm389 = vmor %vm261, %vm373
        %vm390 = vmor %vm262, %vm374
        %vm391 = vmor %vm263, %vm375
        %vm392 = vmor %vm264, %vm376
        %vm393 = vmor %vm265, %vm377
        %vm394 = vmor %vm266, %vm378
        %vm395 = vmor %vm267, %vm379
        %vm396 = vmor %vm268, %vm380
        %vm397 = vmor %vm269, %vm381
        %vm398 = vmor %vm270, %vm382
        %vm399 = vmor %vm271, %vm383
        %vm400 = vmor %vm272, %vm384
        %vm401 = vmor %vm273, %vm385
        %vm402 = vmor %vm274, %vm386
        %vm403 = vmor %vm275, %vm387
        %v404 = vadd.f32 %v145, 32.0
        %v405 = vadd.f32 %v146, 32.0
        %v406 = vadd.f32 %v147, 32.0
        %v407 = vadd.f32 %v148, 32.0
        %v408 = vadd.f32 %v149, 32.0
        %v409 = vadd.f32 %v150, 32.0
        %v410 = vadd.f32 %v151, 32.0
        %v411 = vadd.f32 %v152, 32.0
        %v412 = vadd.f32 %v153, 32.0
        %v413 = vadd.f32 %v154, 32.0
        %v414 = vadd.f32 %v155, 32.0
        %v415 = vadd.f32 %v156, 32.0
        %v416 = vadd.f32 %v157, 32.0
        %v417 = vadd.f32 %v158, 32.0
        %v418 = vadd.f32 %v159, 32.0
        %v419 = vadd.f32 %v160, 32.0
        %421 = vset.pattern.permute.xlu0 9
        %422 = vperm.xlu0 %421, %v404
        %v423 = vpop.permute.xlu0 %422
        %426 = vset.pattern.permute.xlu0 9
        %427 = vperm.xlu0 %426, %v405
        %v428 = vpop.permute.xlu0 %427
        %431 = vset.pattern.permute.xlu0 9
        %432 = vperm.xlu0 %431, %v406
        %v433 = vpop.permute.xlu0 %432
        %436 = vset.pattern.permute.xlu0 9
        %437 = vperm.xlu0 %436, %v407
        %v438 = vpop.permute.xlu0 %437
        %441 = vset.pattern.permute.xlu0 9
        %442 = vperm.xlu0 %441, %v408
        %v443 = vpop.permute.xlu0 %442
        %446 = vset.pattern.permute.xlu0 9
        %447 = vperm.xlu0 %446, %v409
        %v448 = vpop.permute.xlu0 %447
        %451 = vset.pattern.permute.xlu0 9
        %452 = vperm.xlu0 %451, %v410
        %v453 = vpop.permute.xlu0 %452
        %456 = vset.pattern.permute.xlu0 9
        %457 = vperm.xlu0 %456, %v411
        %v458 = vpop.permute.xlu0 %457
        %461 = vset.pattern.permute.xlu0 9
        %462 = vperm.xlu0 %461, %v412
        %v463 = vpop.permute.xlu0 %462
        %466 = vset.pattern.permute.xlu0 9
        %467 = vperm.xlu0 %466, %v413
        %v468 = vpop.permute.xlu0 %467
        %471 = vset.pattern.permute.xlu0 9
        %472 = vperm.xlu0 %471, %v414
        %v473 = vpop.permute.xlu0 %472
        %476 = vset.pattern.permute.xlu0 9
        %477 = vperm.xlu0 %476, %v415
        %v478 = vpop.permute.xlu0 %477
        %481 = vset.pattern.permute.xlu0 9
        %482 = vperm.xlu0 %481, %v416
        %v483 = vpop.permute.xlu0 %482
        %486 = vset.pattern.permute.xlu0 9
        %487 = vperm.xlu0 %486, %v417
        %v488 = vpop.permute.xlu0 %487
        %491 = vset.pattern.permute.xlu0 9
        %492 = vperm.xlu0 %491, %v418
        %v493 = vpop.permute.xlu0 %492
        %496 = vset.pattern.permute.xlu0 9
        %497 = vperm.xlu0 %496, %v419
        %v498 = vpop.permute.xlu0 %497
        %vm500 = vcmp.eq.f32.partialorder %v163, %v423
        %vm501 = vcmp.eq.f32.partialorder %v163, %v428
        %vm502 = vcmp.eq.f32.partialorder %v163, %v433
        %vm503 = vcmp.eq.f32.partialorder %v163, %v438
        %vm504 = vcmp.eq.f32.partialorder %v163, %v443
        %vm505 = vcmp.eq.f32.partialorder %v163, %v448
        %vm506 = vcmp.eq.f32.partialorder %v163, %v453
        %vm507 = vcmp.eq.f32.partialorder %v163, %v458
        %vm508 = vcmp.eq.f32.partialorder %v163, %v463
        %vm509 = vcmp.eq.f32.partialorder %v163, %v468
        %vm510 = vcmp.eq.f32.partialorder %v163, %v473
        %vm511 = vcmp.eq.f32.partialorder %v163, %v478
        %vm512 = vcmp.eq.f32.partialorder %v163, %v483
        %vm513 = vcmp.eq.f32.partialorder %v163, %v488
        %vm514 = vcmp.eq.f32.partialorder %v163, %v493
        %vm515 = vcmp.eq.f32.partialorder %v163, %v498
        %vm516 = vmor %vm388, %vm500
        %vm517 = vmor %vm389, %vm501
        %vm518 = vmor %vm390, %vm502
        %vm519 = vmor %vm391, %vm503
        %vm520 = vmor %vm392, %vm504
        %vm521 = vmor %vm393, %vm505
        %vm522 = vmor %vm394, %vm506
        %vm523 = vmor %vm395, %vm507
        %vm524 = vmor %vm396, %vm508
        %vm525 = vmor %vm397, %vm509
        %vm526 = vmor %vm398, %vm510
        %vm527 = vmor %vm399, %vm511
        %vm528 = vmor %vm400, %vm512
        %vm529 = vmor %vm401, %vm513
        %vm530 = vmor %vm402, %vm514
        %vm531 = vmor %vm403, %vm515
        %v532 = vadd.f32 %v145, 48.0
        %v533 = vadd.f32 %v146, 48.0
        %v534 = vadd.f32 %v147, 48.0
        %v535 = vadd.f32 %v148, 48.0
        %v536 = vadd.f32 %v149, 48.0
        %v537 = vadd.f32 %v150, 48.0
        %v538 = vadd.f32 %v151, 48.0
        %v539 = vadd.f32 %v152, 48.0
        %v540 = vadd.f32 %v153, 48.0
        %v541 = vadd.f32 %v154, 48.0
        %v542 = vadd.f32 %v155, 48.0
        %v543 = vadd.f32 %v156, 48.0
        %v544 = vadd.f32 %v157, 48.0
        %v545 = vadd.f32 %v158, 48.0
        %v546 = vadd.f32 %v159, 48.0
        %v547 = vadd.f32 %v160, 48.0
        %549 = vset.pattern.permute.xlu0 13
        %550 = vperm.xlu0 %549, %v532
        %v551 = vpop.permute.xlu0 %550
        %554 = vset.pattern.permute.xlu0 13
        %555 = vperm.xlu0 %554, %v533
        %v556 = vpop.permute.xlu0 %555
        %559 = vset.pattern.permute.xlu0 13
        %560 = vperm.xlu0 %559, %v534
        %v561 = vpop.permute.xlu0 %560
        %564 = vset.pattern.permute.xlu0 13
        %565 = vperm.xlu0 %564, %v535
        %v566 = vpop.permute.xlu0 %565
        %569 = vset.pattern.permute.xlu0 13
        %570 = vperm.xlu0 %569, %v536
        %v571 = vpop.permute.xlu0 %570
        %574 = vset.pattern.permute.xlu0 13
        %575 = vperm.xlu0 %574, %v537
        %v576 = vpop.permute.xlu0 %575
        %579 = vset.pattern.permute.xlu0 13
        %580 = vperm.xlu0 %579, %v538
        %v581 = vpop.permute.xlu0 %580
        %584 = vset.pattern.permute.xlu0 13
        %585 = vperm.xlu0 %584, %v539
        %v586 = vpop.permute.xlu0 %585
        %589 = vset.pattern.permute.xlu0 13
        %590 = vperm.xlu0 %589, %v540
        %v591 = vpop.permute.xlu0 %590
        %594 = vset.pattern.permute.xlu0 13
        %595 = vperm.xlu0 %594, %v541
        %v596 = vpop.permute.xlu0 %595
        %599 = vset.pattern.permute.xlu0 13
        %600 = vperm.xlu0 %599, %v542
        %v601 = vpop.permute.xlu0 %600
        %604 = vset.pattern.permute.xlu0 13
        %605 = vperm.xlu0 %604, %v543
        %v606 = vpop.permute.xlu0 %605
        %609 = vset.pattern.permute.xlu0 13
        %610 = vperm.xlu0 %609, %v544
        %v611 = vpop.permute.xlu0 %610
        %614 = vset.pattern.permute.xlu0 13
        %615 = vperm.xlu0 %614, %v545
        %v616 = vpop.permute.xlu0 %615
        %619 = vset.pattern.permute.xlu0 13
        %620 = vperm.xlu0 %619, %v546
        %v621 = vpop.permute.xlu0 %620
        %624 = vset.pattern.permute.xlu0 13
        %625 = vperm.xlu0 %624, %v547
        %v626 = vpop.permute.xlu0 %625
        %vm628 = vcmp.eq.f32.partialorder %v163, %v551
        %vm629 = vcmp.eq.f32.partialorder %v163, %v556
        %vm630 = vcmp.eq.f32.partialorder %v163, %v561
        %vm631 = vcmp.eq.f32.partialorder %v163, %v566
        %vm632 = vcmp.eq.f32.partialorder %v163, %v571
        %vm633 = vcmp.eq.f32.partialorder %v163, %v576
        %vm634 = vcmp.eq.f32.partialorder %v163, %v581
        %vm635 = vcmp.eq.f32.partialorder %v163, %v586
        %vm636 = vcmp.eq.f32.partialorder %v163, %v591
        %vm637 = vcmp.eq.f32.partialorder %v163, %v596
        %vm638 = vcmp.eq.f32.partialorder %v163, %v601
        %vm639 = vcmp.eq.f32.partialorder %v163, %v606
        %vm640 = vcmp.eq.f32.partialorder %v163, %v611
        %vm641 = vcmp.eq.f32.partialorder %v163, %v616
        %vm642 = vcmp.eq.f32.partialorder %v163, %v621
        %vm643 = vcmp.eq.f32.partialorder %v163, %v626
        %vm644 = vmor %vm516, %vm628
        %vm645 = vmor %vm517, %vm629
        %vm646 = vmor %vm518, %vm630
        %vm647 = vmor %vm519, %vm631
        %vm648 = vmor %vm520, %vm632
        %vm649 = vmor %vm521, %vm633
        %vm650 = vmor %vm522, %vm634
        %vm651 = vmor %vm523, %vm635
        %vm652 = vmor %vm524, %vm636
        %vm653 = vmor %vm525, %vm637
        %vm654 = vmor %vm526, %vm638
        %vm655 = vmor %vm527, %vm639
        %vm656 = vmor %vm528, %vm640
        %vm657 = vmor %vm529, %vm641
        %vm658 = vmor %vm530, %vm642
        %vm659 = vmor %vm531, %vm643
        %v660 = vsel %vm644, 1, 0
        %v661 = vsel %vm645, 1, 0
        %v662 = vsel %vm646, 1, 0
        %v663 = vsel %vm647, 1, 0
        %v664 = vsel %vm648, 1, 0
        %v665 = vsel %vm649, 1, 0
        %v666 = vsel %vm650, 1, 0
        %v667 = vsel %vm651, 1, 0
        %v668 = vsel %vm652, 1, 0
        %v669 = vsel %vm653, 1, 0
        %v670 = vsel %vm654, 1, 0
        %v671 = vsel %vm655, 1, 0
        %v672 = vsel %vm656, 1, 0
        %v673 = vsel %vm657, 1, 0
        %v674 = vsel %vm658, 1, 0
        %v675 = vsel %vm659, 1, 0
        %v676 = vcvt.s32.f32 %v660
        %v677 = vcvt.s32.f32 %v661
        %v678 = vcvt.s32.f32 %v662
        %v679 = vcvt.s32.f32 %v663
        %v680 = vcvt.s32.f32 %v664
        %v681 = vcvt.s32.f32 %v665
        %v682 = vcvt.s32.f32 %v666
        %v683 = vcvt.s32.f32 %v667
        %v684 = vcvt.s32.f32 %v668
        %v685 = vcvt.s32.f32 %v669
        %v686 = vcvt.s32.f32 %v670
        %v687 = vcvt.s32.f32 %v671
        %v688 = vcvt.s32.f32 %v672
        %v689 = vcvt.s32.f32 %v673
        %v690 = vcvt.s32.f32 %v674
        %v691 = vcvt.s32.f32 %v675
        %v692 = vld [vmem:[%s1] sm:$0xff]
        %v693 = vld [vmem:[%s1 + $0x8] sm:$0xff]
        %v694 = vld [vmem:[%s1 + $0x10] sm:$0xff]
        %v695 = vld [vmem:[%s1 + $0x18] sm:$0xff]
        %v696 = vld [vmem:[%s1 + $0x20] sm:$0xff]
        %v697 = vld [vmem:[%s1 + $0x28] sm:$0xff]
        %v698 = vld [vmem:[%s1 + $0x30] sm:$0xff]
        %v699 = vld [vmem:[%s1 + $0x38] sm:$0xff]
        %v700 = vld [vmem:[%s1 + $0x40] sm:$0xff]
        %v701 = vld [vmem:[%s1 + $0x48] sm:$0xff]
        %vm702 = vcmask 523264
        %v704 = vsel %vm702, %v676, 0
        %v707 = vsel %vm702, %v677, 0
        %v710 = vsel %vm702, %v678, 0
        %v713 = vsel %vm702, %v679, 0
        %v716 = vsel %vm702, %v680, 0
        %v719 = vsel %vm702, %v681, 0
        %v722 = vsel %vm702, %v682, 0
        %v725 = vsel %vm702, %v683, 0
        %v728 = vsel %vm702, %v684, 0
        %v731 = vsel %vm702, %v685, 0
        %v734 = vsel %vm702, %v686, 0
        %v737 = vsel %vm702, %v687, 0
        %v740 = vsel %vm702, %v688, 0
        %v743 = vsel %vm702, %v689, 0
        %v746 = vsel %vm702, %v690, 0
        %v749 = vsel %vm702, %v691, 0
        %751 = vmatpush.msra.mxu0 0.0
        %752 = vmatpush.msra.mxu0 0.0
        %753 = vmatpush.msra.mxu0 0.0
        %754 = vmatpush.msra.mxu0 0.0
        %755 = vmatpush.msra.mxu0 0.0
        %756 = vmatpush.msra.mxu0 0.0
        %757 = vmatpush.msra.mxu0 0.0
        %758 = vmatpush.msra.mxu0 0.0
        %v759 = vand.u32 %v701, 4294901760
        %760 = vmatpush.msra.mxu0 %v759
        %v761 = vand.u32 %v700, 4294901760
        %762 = vmatpush.msra.mxu0 %v761
        %v763 = vand.u32 %v699, 4294901760
        %764 = vmatpush.msra.mxu0 %v763
        %v765 = vand.u32 %v698, 4294901760
        %766 = vmatpush.msra.mxu0 %v765
        %v767 = vand.u32 %v697, 4294901760
        %768 = vmatpush.msra.mxu0 %v767
        %v769 = vand.u32 %v696, 4294901760
        %770 = vmatpush.msra.mxu0 %v769
        %v771 = vand.u32 %v695, 4294901760
        %772 = vmatpush.msra.mxu0 %v771
        %v773 = vand.u32 %v694, 4294901760
        %774 = vmatpush.msra.mxu0 %v773
        %v775 = vand.u32 %v704, 4294901760
        %v776 = vsub.f32 %v704, %v775
        %v777 = vand.u32 %v776, 4294901760
        %v778 = vsub.f32 %v776, %v777
        %v779 = vand.u32 %v778, 4294901760
        %780 = vmatmul.f32.gmra.mxu0 %v779
        %v781 = vpop.f32.mrf.mxu0
        %v782 = vadd.f32 0.0, %v781
        %v783 = vand.u32 %v707, 4294901760
        %v784 = vsub.f32 %v707, %v783
        %v785 = vand.u32 %v784, 4294901760
        %v786 = vsub.f32 %v784, %v785
        %v787 = vand.u32 %v786, 4294901760
        %788 = vmatmul.f32.gmra.mxu0 %v787
        %v789 = vpop.f32.mrf.mxu0
        %v790 = vadd.f32 0.0, %v789
        %v791 = vand.u32 %v710, 4294901760
        %v792 = vsub.f32 %v710, %v791
        %v793 = vand.u32 %v792, 4294901760
        %v794 = vsub.f32 %v792, %v793
        %v795 = vand.u32 %v794, 4294901760
        %796 = vmatmul.f32.gmra.mxu0 %v795
        %v797 = vpop.f32.mrf.mxu0
        %v798 = vadd.f32 0.0, %v797
        %v799 = vand.u32 %v713, 4294901760
        %v800 = vsub.f32 %v713, %v799
        %v801 = vand.u32 %v800, 4294901760
        %v802 = vsub.f32 %v800, %v801
        %v803 = vand.u32 %v802, 4294901760
        %804 = vmatmul.f32.gmra.mxu0 %v803
        %v805 = vpop.f32.mrf.mxu0
        %v806 = vadd.f32 0.0, %v805
        %v807 = vand.u32 %v716, 4294901760
        %v808 = vsub.f32 %v716, %v807
        %v809 = vand.u32 %v808, 4294901760
        %v810 = vsub.f32 %v808, %v809
        %v811 = vand.u32 %v810, 4294901760
        %812 = vmatmul.f32.gmra.mxu0 %v811
        %v813 = vpop.f32.mrf.mxu0
        %v814 = vadd.f32 0.0, %v813
        %v815 = vand.u32 %v719, 4294901760
        %v816 = vsub.f32 %v719, %v815
        %v817 = vand.u32 %v816, 4294901760
        %v818 = vsub.f32 %v816, %v817
        %v819 = vand.u32 %v818, 4294901760
        %820 = vmatmul.f32.gmra.mxu0 %v819
        %v821 = vpop.f32.mrf.mxu0
        %v822 = vadd.f32 0.0, %v821
        %v823 = vand.u32 %v722, 4294901760
        %v824 = vsub.f32 %v722, %v823
        %v825 = vand.u32 %v824, 4294901760
        %v826 = vsub.f32 %v824, %v825
        %v827 = vand.u32 %v826, 4294901760
        %828 = vmatmul.f32.gmra.mxu0 %v827
        %v829 = vpop.f32.mrf.mxu0
        %v830 = vadd.f32 0.0, %v829
        %v831 = vand.u32 %v725, 4294901760
        %v832 = vsub.f32 %v725, %v831
        %v833 = vand.u32 %v832, 4294901760
        %v834 = vsub.f32 %v832, %v833
        %v835 = vand.u32 %v834, 4294901760
        %836 = vmatmul.f32.gmra.mxu0 %v835
        %v837 = vpop.f32.mrf.mxu0
        %v838 = vadd.f32 0.0, %v837
        %v839 = vand.u32 %v728, 4294901760
        %v840 = vsub.f32 %v728, %v839
        %v841 = vand.u32 %v840, 4294901760
        %v842 = vsub.f32 %v840, %v841
        %v843 = vand.u32 %v842, 4294901760
        %844 = vmatmul.f32.gmra.mxu0 %v843
        %v845 = vpop.f32.mrf.mxu0
        %v846 = vadd.f32 0.0, %v845
        %v847 = vand.u32 %v731, 4294901760
        %v848 = vsub.f32 %v731, %v847
        %v849 = vand.u32 %v848, 4294901760
        %v850 = vsub.f32 %v848, %v849
        %v851 = vand.u32 %v850, 4294901760
        %852 = vmatmul.f32.gmra.mxu0 %v851
        %v853 = vpop.f32.mrf.mxu0
        %v854 = vadd.f32 0.0, %v853
        %v855 = vand.u32 %v734, 4294901760
        %v856 = vsub.f32 %v734, %v855
        %v857 = vand.u32 %v856, 4294901760
        %v858 = vsub.f32 %v856, %v857
        %v859 = vand.u32 %v858, 4294901760
        %860 = vmatmul.f32.gmra.mxu0 %v859
        %v861 = vpop.f32.mrf.mxu0
        %v862 = vadd.f32 0.0, %v861
        %v863 = vand.u32 %v737, 4294901760
        %v864 = vsub.f32 %v737, %v863
        %v865 = vand.u32 %v864, 4294901760
        %v866 = vsub.f32 %v864, %v865
        %v867 = vand.u32 %v866, 4294901760
        %868 = vmatmul.f32.gmra.mxu0 %v867
        %v869 = vpop.f32.mrf.mxu0
        %v870 = vadd.f32 0.0, %v869
        %v871 = vand.u32 %v740, 4294901760
        %v872 = vsub.f32 %v740, %v871
        %v873 = vand.u32 %v872, 4294901760
        %v874 = vsub.f32 %v872, %v873
        %v875 = vand.u32 %v874, 4294901760
        %876 = vmatmul.f32.gmra.mxu0 %v875
        %v877 = vpop.f32.mrf.mxu0
        %v878 = vadd.f32 0.0, %v877
        %v879 = vand.u32 %v743, 4294901760
        %v880 = vsub.f32 %v743, %v879
        %v881 = vand.u32 %v880, 4294901760
        %v882 = vsub.f32 %v880, %v881
        %v883 = vand.u32 %v882, 4294901760
        %884 = vmatmul.f32.gmra.mxu0 %v883
        %v885 = vpop.f32.mrf.mxu0
        %v886 = vadd.f32 0.0, %v885
        %v887 = vand.u32 %v746, 4294901760
        %v888 = vsub.f32 %v746, %v887
        %v889 = vand.u32 %v888, 4294901760
        %v890 = vsub.f32 %v888, %v889
        %v891 = vand.u32 %v890, 4294901760
        %892 = vmatmul.f32.gmra.mxu0 %v891
        %v893 = vpop.f32.mrf.mxu0
        %v894 = vadd.f32 0.0, %v893
        %v895 = vand.u32 %v749, 4294901760
        %v896 = vsub.f32 %v749, %v895
        %v897 = vand.u32 %v896, 4294901760
        %v898 = vsub.f32 %v896, %v897
        %v899 = vand.u32 %v898, 4294901760
        %900 = vmatmul.f32.gmra.mxu0 %v899
        %v901 = vpop.f32.mrf.mxu0
        %v902 = vadd.f32 0.0, %v901
        %903 = vdwg.mxu0
        %904 = vmatpush.msra.mxu0 0.0
        %905 = vmatpush.msra.mxu0 0.0
        %906 = vmatpush.msra.mxu0 0.0
        %907 = vmatpush.msra.mxu0 0.0
        %908 = vmatpush.msra.mxu0 0.0
        %909 = vmatpush.msra.mxu0 0.0
        %910 = vmatpush.msra.mxu0 0.0
        %911 = vmatpush.msra.mxu0 0.0
        %v912 = vand.u32 %v701, 4294901760
        %v913 = vsub.f32 %v701, %v912
        %v914 = vand.u32 %v913, 4294901760
        %v915 = vsub.f32 %v913, %v914
        %v916 = vand.u32 %v915, 4294901760
        %917 = vmatpush.msra.mxu0 %v916
        %v918 = vand.u32 %v700, 4294901760
        %v919 = vsub.f32 %v700, %v918
        %v920 = vand.u32 %v919, 4294901760
        %v921 = vsub.f32 %v919, %v920
        %v922 = vand.u32 %v921, 4294901760
        %923 = vmatpush.msra.mxu0 %v922
        %v924 = vand.u32 %v699, 4294901760
        %v925 = vsub.f32 %v699, %v924
        %v926 = vand.u32 %v925, 4294901760
        %v927 = vsub.f32 %v925, %v926
        %v928 = vand.u32 %v927, 4294901760
        %929 = vmatpush.msra.mxu0 %v928
        %v930 = vand.u32 %v698, 4294901760
        %v931 = vsub.f32 %v698, %v930
        %v932 = vand.u32 %v931, 4294901760
        %v933 = vsub.f32 %v931, %v932
        %v934 = vand.u32 %v933, 4294901760
        %935 = vmatpush.msra.mxu0 %v934
        %v936 = vand.u32 %v697, 4294901760
        %v937 = vsub.f32 %v697, %v936
        %v938 = vand.u32 %v937, 4294901760
        %v939 = vsub.f32 %v937, %v938
        %v940 = vand.u32 %v939, 4294901760
        %941 = vmatpush.msra.mxu0 %v940
        %v942 = vand.u32 %v696, 4294901760
        %v943 = vsub.f32 %v696, %v942
        %v944 = vand.u32 %v943, 4294901760
        %v945 = vsub.f32 %v943, %v944
        %v946 = vand.u32 %v945, 4294901760
        %947 = vmatpush.msra.mxu0 %v946
        %v948 = vand.u32 %v695, 4294901760
        %v949 = vsub.f32 %v695, %v948
        %v950 = vand.u32 %v949, 4294901760
        %v951 = vsub.f32 %v949, %v950
        %v952 = vand.u32 %v951, 4294901760
        %953 = vmatpush.msra.mxu0 %v952
        %v954 = vand.u32 %v694, 4294901760
        %v955 = vsub.f32 %v694, %v954
        %v956 = vand.u32 %v955, 4294901760
        %v957 = vsub.f32 %v955, %v956
        %v958 = vand.u32 %v957, 4294901760
        %959 = vmatpush.msra.mxu0 %v958
        %v960 = vand.u32 %v704, 4294901760
        %961 = vmatmul.f32.gmra.mxu0 %v960
        %v962 = vpop.f32.mrf.mxu0
        %v963 = vadd.f32 %v782, %v962
        %v964 = vand.u32 %v707, 4294901760
        %965 = vmatmul.f32.gmra.mxu0 %v964
        %v966 = vpop.f32.mrf.mxu0
        %v967 = vadd.f32 %v790, %v966
        %v968 = vand.u32 %v710, 4294901760
        %969 = vmatmul.f32.gmra.mxu0 %v968
        %v970 = vpop.f32.mrf.mxu0
        %v971 = vadd.f32 %v798, %v970
        %v972 = vand.u32 %v713, 4294901760
        %973 = vmatmul.f32.gmra.mxu0 %v972
        %v974 = vpop.f32.mrf.mxu0
        %v975 = vadd.f32 %v806, %v974
        %v976 = vand.u32 %v716, 4294901760
        %977 = vmatmul.f32.gmra.mxu0 %v976
        %v978 = vpop.f32.mrf.mxu0
        %v979 = vadd.f32 %v814, %v978
        %v980 = vand.u32 %v719, 4294901760
        %981 = vmatmul.f32.gmra.mxu0 %v980
        %v982 = vpop.f32.mrf.mxu0
        %v983 = vadd.f32 %v822, %v982
        %v984 = vand.u32 %v722, 4294901760
        %985 = vmatmul.f32.gmra.mxu0 %v984
        %v986 = vpop.f32.mrf.mxu0
        %v987 = vadd.f32 %v830, %v986
        %v988 = vand.u32 %v725, 4294901760
        %989 = vmatmul.f32.gmra.mxu0 %v988
        %v990 = vpop.f32.mrf.mxu0
        %v991 = vadd.f32 %v838, %v990
        %v992 = vand.u32 %v728, 4294901760
        %993 = vmatmul.f32.gmra.mxu0 %v992
        %v994 = vpop.f32.mrf.mxu0
        %v995 = vadd.f32 %v846, %v994
        %v996 = vand.u32 %v731, 4294901760
        %997 = vmatmul.f32.gmra.mxu0 %v996
        %v998 = vpop.f32.mrf.mxu0
        %v999 = vadd.f32 %v854, %v998
        %v1000 = vand.u32 %v734, 4294901760
        %1001 = vmatmul.f32.gmra.mxu0 %v1000
        %v1002 = vpop.f32.mrf.mxu0
        %v1003 = vadd.f32 %v862, %v1002
        %v1004 = vand.u32 %v737, 4294901760
        %1005 = vmatmul.f32.gmra.mxu0 %v1004
        %v1006 = vpop.f32.mrf.mxu0
        %v1007 = vadd.f32 %v870, %v1006
        %v1008 = vand.u32 %v740, 4294901760
        %1009 = vmatmul.f32.gmra.mxu0 %v1008
        %v1010 = vpop.f32.mrf.mxu0
        %v1011 = vadd.f32 %v878, %v1010
        %v1012 = vand.u32 %v743, 4294901760
        %1013 = vmatmul.f32.gmra.mxu0 %v1012
        %v1014 = vpop.f32.mrf.mxu0
        %v1015 = vadd.f32 %v886, %v1014
        %v1016 = vand.u32 %v746, 4294901760
        %1017 = vmatmul.f32.gmra.mxu0 %v1016
        %v1018 = vpop.f32.mrf.mxu0
        %v1019 = vadd.f32 %v894, %v1018
        %v1020 = vand.u32 %v749, 4294901760
        %1021 = vmatmul.f32.gmra.mxu0 %v1020
        %v1022 = vpop.f32.mrf.mxu0
        %v1023 = vadd.f32 %v902, %v1022
        %1024 = vdwg.mxu0
        %1025 = vmatpush.msra.mxu0 0.0
        %1026 = vmatpush.msra.mxu0 0.0
        %1027 = vmatpush.msra.mxu0 0.0
        %1028 = vmatpush.msra.mxu0 0.0
        %1029 = vmatpush.msra.mxu0 0.0
        %1030 = vmatpush.msra.mxu0 0.0
        %1031 = vmatpush.msra.mxu0 0.0
        %1032 = vmatpush.msra.mxu0 0.0
        %v1033 = vand.u32 %v701, 4294901760
        %v1034 = vsub.f32 %v701, %v1033
        %1035 = vmatpush.msra.mxu0 %v1034
        %v1036 = vand.u32 %v700, 4294901760
        %v1037 = vsub.f32 %v700, %v1036
        %1038 = vmatpush.msra.mxu0 %v1037
        %v1039 = vand.u32 %v699, 4294901760
        %v1040 = vsub.f32 %v699, %v1039
        %1041 = vmatpush.msra.mxu0 %v1040
        %v1042 = vand.u32 %v698, 4294901760
        %v1043 = vsub.f32 %v698, %v1042
        %1044 = vmatpush.msra.mxu0 %v1043
        %v1045 = vand.u32 %v697, 4294901760
        %v1046 = vsub.f32 %v697, %v1045
        %1047 = vmatpush.msra.mxu0 %v1046
        %v1048 = vand.u32 %v696, 4294901760
        %v1049 = vsub.f32 %v696, %v1048
        %1050 = vmatpush.msra.mxu0 %v1049
        %v1051 = vand.u32 %v695, 4294901760
        %v1052 = vsub.f32 %v695, %v1051
        %1053 = vmatpush.msra.mxu0 %v1052
        %v1054 = vand.u32 %v694, 4294901760
        %v1055 = vsub.f32 %v694, %v1054
        %1056 = vmatpush.msra.mxu0 %v1055
        %v1057 = vand.u32 %v704, 4294901760
        %v1058 = vsub.f32 %v704, %v1057
        %1059 = vmatmul.f32.gmra.mxu0 %v1058
        %v1060 = vpop.f32.mrf.mxu0
        %v1061 = vadd.f32 %v963, %v1060
        %v1062 = vand.u32 %v707, 4294901760
        %v1063 = vsub.f32 %v707, %v1062
        %1064 = vmatmul.f32.gmra.mxu0 %v1063
        %v1065 = vpop.f32.mrf.mxu0
        %v1066 = vadd.f32 %v967, %v1065
        %v1067 = vand.u32 %v710, 4294901760
        %v1068 = vsub.f32 %v710, %v1067
        %1069 = vmatmul.f32.gmra.mxu0 %v1068
        %v1070 = vpop.f32.mrf.mxu0
        %v1071 = vadd.f32 %v971, %v1070
        %v1072 = vand.u32 %v713, 4294901760
        %v1073 = vsub.f32 %v713, %v1072
        %1074 = vmatmul.f32.gmra.mxu0 %v1073
        %v1075 = vpop.f32.mrf.mxu0
        %v1076 = vadd.f32 %v975, %v1075
        %v1077 = vand.u32 %v716, 4294901760
        %v1078 = vsub.f32 %v716, %v1077
        %1079 = vmatmul.f32.gmra.mxu0 %v1078
        %v1080 = vpop.f32.mrf.mxu0
        %v1081 = vadd.f32 %v979, %v1080
        %v1082 = vand.u32 %v719, 4294901760
        %v1083 = vsub.f32 %v719, %v1082
        %1084 = vmatmul.f32.gmra.mxu0 %v1083
        %v1085 = vpop.f32.mrf.mxu0
        %v1086 = vadd.f32 %v983, %v1085
        %v1087 = vand.u32 %v722, 4294901760
        %v1088 = vsub.f32 %v722, %v1087
        %1089 = vmatmul.f32.gmra.mxu0 %v1088
        %v1090 = vpop.f32.mrf.mxu0
        %v1091 = vadd.f32 %v987, %v1090
        %v1092 = vand.u32 %v725, 4294901760
        %v1093 = vsub.f32 %v725, %v1092
        %1094 = vmatmul.f32.gmra.mxu0 %v1093
        %v1095 = vpop.f32.mrf.mxu0
        %v1096 = vadd.f32 %v991, %v1095
        %v1097 = vand.u32 %v728, 4294901760
        %v1098 = vsub.f32 %v728, %v1097
        %1099 = vmatmul.f32.gmra.mxu0 %v1098
        %v1100 = vpop.f32.mrf.mxu0
        %v1101 = vadd.f32 %v995, %v1100
        %v1102 = vand.u32 %v731, 4294901760
        %v1103 = vsub.f32 %v731, %v1102
        %1104 = vmatmul.f32.gmra.mxu0 %v1103
        %v1105 = vpop.f32.mrf.mxu0
        %v1106 = vadd.f32 %v999, %v1105
        %v1107 = vand.u32 %v734, 4294901760
        %v1108 = vsub.f32 %v734, %v1107
        %1109 = vmatmul.f32.gmra.mxu0 %v1108
        %v1110 = vpop.f32.mrf.mxu0
        %v1111 = vadd.f32 %v1003, %v1110
        %v1112 = vand.u32 %v737, 4294901760
        %v1113 = vsub.f32 %v737, %v1112
        %1114 = vmatmul.f32.gmra.mxu0 %v1113
        %v1115 = vpop.f32.mrf.mxu0
        %v1116 = vadd.f32 %v1007, %v1115
        %v1117 = vand.u32 %v740, 4294901760
        %v1118 = vsub.f32 %v740, %v1117
        %1119 = vmatmul.f32.gmra.mxu0 %v1118
        %v1120 = vpop.f32.mrf.mxu0
        %v1121 = vadd.f32 %v1011, %v1120
        %v1122 = vand.u32 %v743, 4294901760
        %v1123 = vsub.f32 %v743, %v1122
        %1124 = vmatmul.f32.gmra.mxu0 %v1123
        %v1125 = vpop.f32.mrf.mxu0
        %v1126 = vadd.f32 %v1015, %v1125
        %v1127 = vand.u32 %v746, 4294901760
        %v1128 = vsub.f32 %v746, %v1127
        %1129 = vmatmul.f32.gmra.mxu0 %v1128
        %v1130 = vpop.f32.mrf.mxu0
        %v1131 = vadd.f32 %v1019, %v1130
        %v1132 = vand.u32 %v749, 4294901760
        %v1133 = vsub.f32 %v749, %v1132
        %1134 = vmatmul.f32.gmra.mxu0 %v1133
        %v1135 = vpop.f32.mrf.mxu0
        %v1136 = vadd.f32 %v1023, %v1135
        %1137 = vdwg.mxu0
        %1138 = vmatpush.msra.mxu0 0.0
        %1139 = vmatpush.msra.mxu0 0.0
        %1140 = vmatpush.msra.mxu0 0.0
        %1141 = vmatpush.msra.mxu0 0.0
        %1142 = vmatpush.msra.mxu0 0.0
        %1143 = vmatpush.msra.mxu0 0.0
        %1144 = vmatpush.msra.mxu0 0.0
        %1145 = vmatpush.msra.mxu0 0.0
        %v1146 = vand.u32 %v701, 4294901760
        %1147 = vmatpush.msra.mxu0 %v1146
        %v1148 = vand.u32 %v700, 4294901760
        %1149 = vmatpush.msra.mxu0 %v1148
        %v1150 = vand.u32 %v699, 4294901760
        %1151 = vmatpush.msra.mxu0 %v1150
        %v1152 = vand.u32 %v698, 4294901760
        %1153 = vmatpush.msra.mxu0 %v1152
        %v1154 = vand.u32 %v697, 4294901760
        %1155 = vmatpush.msra.mxu0 %v1154
        %v1156 = vand.u32 %v696, 4294901760
        %1157 = vmatpush.msra.mxu0 %v1156
        %v1158 = vand.u32 %v695, 4294901760
        %1159 = vmatpush.msra.mxu0 %v1158
        %v1160 = vand.u32 %v694, 4294901760
        %1161 = vmatpush.msra.mxu0 %v1160
        %v1162 = vand.u32 %v704, 4294901760
        %v1163 = vsub.f32 %v704, %v1162
        %v1164 = vand.u32 %v1163, 4294901760
        %1165 = vmatmul.f32.gmra.mxu0 %v1164
        %v1166 = vpop.f32.mrf.mxu0
        %v1167 = vadd.f32 %v1061, %v1166
        %v1168 = vand.u32 %v707, 4294901760
        %v1169 = vsub.f32 %v707, %v1168
        %v1170 = vand.u32 %v1169, 4294901760
        %1171 = vmatmul.f32.gmra.mxu0 %v1170
        %v1172 = vpop.f32.mrf.mxu0
        %v1173 = vadd.f32 %v1066, %v1172
        %v1174 = vand.u32 %v710, 4294901760
        %v1175 = vsub.f32 %v710, %v1174
        %v1176 = vand.u32 %v1175, 4294901760
        %1177 = vmatmul.f32.gmra.mxu0 %v1176
        %v1178 = vpop.f32.mrf.mxu0
        %v1179 = vadd.f32 %v1071, %v1178
        %v1180 = vand.u32 %v713, 4294901760
        %v1181 = vsub.f32 %v713, %v1180
        %v1182 = vand.u32 %v1181, 4294901760
        %1183 = vmatmul.f32.gmra.mxu0 %v1182
        %v1184 = vpop.f32.mrf.mxu0
        %v1185 = vadd.f32 %v1076, %v1184
        %v1186 = vand.u32 %v716, 4294901760
        %v1187 = vsub.f32 %v716, %v1186
        %v1188 = vand.u32 %v1187, 4294901760
        %1189 = vmatmul.f32.gmra.mxu0 %v1188
        %v1190 = vpop.f32.mrf.mxu0
        %v1191 = vadd.f32 %v1081, %v1190
        %v1192 = vand.u32 %v719, 4294901760
        %v1193 = vsub.f32 %v719, %v1192
        %v1194 = vand.u32 %v1193, 4294901760
        %1195 = vmatmul.f32.gmra.mxu0 %v1194
        %v1196 = vpop.f32.mrf.mxu0
        %v1197 = vadd.f32 %v1086, %v1196
        %v1198 = vand.u32 %v722, 4294901760
        %v1199 = vsub.f32 %v722, %v1198
        %v1200 = vand.u32 %v1199, 4294901760
        %1201 = vmatmul.f32.gmra.mxu0 %v1200
        %v1202 = vpop.f32.mrf.mxu0
        %v1203 = vadd.f32 %v1091, %v1202
        %v1204 = vand.u32 %v725, 4294901760
        %v1205 = vsub.f32 %v725, %v1204
        %v1206 = vand.u32 %v1205, 4294901760
        %1207 = vmatmul.f32.gmra.mxu0 %v1206
        %v1208 = vpop.f32.mrf.mxu0
        %v1209 = vadd.f32 %v1096, %v1208
        %v1210 = vand.u32 %v728, 4294901760
        %v1211 = vsub.f32 %v728, %v1210
        %v1212 = vand.u32 %v1211, 4294901760
        %1213 = vmatmul.f32.gmra.mxu0 %v1212
        %v1214 = vpop.f32.mrf.mxu0
        %v1215 = vadd.f32 %v1101, %v1214
        %v1216 = vand.u32 %v731, 4294901760
        %v1217 = vsub.f32 %v731, %v1216
        %v1218 = vand.u32 %v1217, 4294901760
        %1219 = vmatmul.f32.gmra.mxu0 %v1218
        %v1220 = vpop.f32.mrf.mxu0
        %v1221 = vadd.f32 %v1106, %v1220
        %v1222 = vand.u32 %v734, 4294901760
        %v1223 = vsub.f32 %v734, %v1222
        %v1224 = vand.u32 %v1223, 4294901760
        %1225 = vmatmul.f32.gmra.mxu0 %v1224
        %v1226 = vpop.f32.mrf.mxu0
        %v1227 = vadd.f32 %v1111, %v1226
        %v1228 = vand.u32 %v737, 4294901760
        %v1229 = vsub.f32 %v737, %v1228
        %v1230 = vand.u32 %v1229, 4294901760
        %1231 = vmatmul.f32.gmra.mxu0 %v1230
        %v1232 = vpop.f32.mrf.mxu0
        %v1233 = vadd.f32 %v1116, %v1232
        %v1234 = vand.u32 %v740, 4294901760
        %v1235 = vsub.f32 %v740, %v1234
        %v1236 = vand.u32 %v1235, 4294901760
        %1237 = vmatmul.f32.gmra.mxu0 %v1236
        %v1238 = vpop.f32.mrf.mxu0
        %v1239 = vadd.f32 %v1121, %v1238
        %v1240 = vand.u32 %v743, 4294901760
        %v1241 = vsub.f32 %v743, %v1240
        %v1242 = vand.u32 %v1241, 4294901760
        %1243 = vmatmul.f32.gmra.mxu0 %v1242
        %v1244 = vpop.f32.mrf.mxu0
        %v1245 = vadd.f32 %v1126, %v1244
        %v1246 = vand.u32 %v746, 4294901760
        %v1247 = vsub.f32 %v746, %v1246
        %v1248 = vand.u32 %v1247, 4294901760
        %1249 = vmatmul.f32.gmra.mxu0 %v1248
        %v1250 = vpop.f32.mrf.mxu0
        %v1251 = vadd.f32 %v1131, %v1250
        %v1252 = vand.u32 %v749, 4294901760
        %v1253 = vsub.f32 %v749, %v1252
        %v1254 = vand.u32 %v1253, 4294901760
        %1255 = vmatmul.f32.gmra.mxu0 %v1254
        %v1256 = vpop.f32.mrf.mxu0
        %v1257 = vadd.f32 %v1136, %v1256
        %1258 = vdwg.mxu0
        %1259 = vmatpush.msra.mxu0 0.0
        %1260 = vmatpush.msra.mxu0 0.0
        %1261 = vmatpush.msra.mxu0 0.0
        %1262 = vmatpush.msra.mxu0 0.0
        %1263 = vmatpush.msra.mxu0 0.0
        %1264 = vmatpush.msra.mxu0 0.0
        %1265 = vmatpush.msra.mxu0 0.0
        %1266 = vmatpush.msra.mxu0 0.0
        %v1267 = vand.u32 %v701, 4294901760
        %v1268 = vsub.f32 %v701, %v1267
        %v1269 = vand.u32 %v1268, 4294901760
        %1270 = vmatpush.msra.mxu0 %v1269
        %v1271 = vand.u32 %v700, 4294901760
        %v1272 = vsub.f32 %v700, %v1271
        %v1273 = vand.u32 %v1272, 4294901760
        %1274 = vmatpush.msra.mxu0 %v1273
        %v1275 = vand.u32 %v699, 4294901760
        %v1276 = vsub.f32 %v699, %v1275
        %v1277 = vand.u32 %v1276, 4294901760
        %1278 = vmatpush.msra.mxu0 %v1277
        %v1279 = vand.u32 %v698, 4294901760
        %v1280 = vsub.f32 %v698, %v1279
        %v1281 = vand.u32 %v1280, 4294901760
        %1282 = vmatpush.msra.mxu0 %v1281
        %v1283 = vand.u32 %v697, 4294901760
        %v1284 = vsub.f32 %v697, %v1283
        %v1285 = vand.u32 %v1284, 4294901760
        %1286 = vmatpush.msra.mxu0 %v1285
        %v1287 = vand.u32 %v696, 4294901760
        %v1288 = vsub.f32 %v696, %v1287
        %v1289 = vand.u32 %v1288, 4294901760
        %1290 = vmatpush.msra.mxu0 %v1289
        %v1291 = vand.u32 %v695, 4294901760
        %v1292 = vsub.f32 %v695, %v1291
        %v1293 = vand.u32 %v1292, 4294901760
        %1294 = vmatpush.msra.mxu0 %v1293
        %v1295 = vand.u32 %v694, 4294901760
        %v1296 = vsub.f32 %v694, %v1295
        %v1297 = vand.u32 %v1296, 4294901760
        %1298 = vmatpush.msra.mxu0 %v1297
        %v1299 = vand.u32 %v704, 4294901760
        %1300 = vmatmul.f32.gmra.mxu0 %v1299
        %v1301 = vpop.f32.mrf.mxu0
        %v1302 = vadd.f32 %v1167, %v1301
        %v1303 = vand.u32 %v707, 4294901760
        %1304 = vmatmul.f32.gmra.mxu0 %v1303
        %v1305 = vpop.f32.mrf.mxu0
        %v1306 = vadd.f32 %v1173, %v1305
        %v1307 = vand.u32 %v710, 4294901760
        %1308 = vmatmul.f32.gmra.mxu0 %v1307
        %v1309 = vpop.f32.mrf.mxu0
        %v1310 = vadd.f32 %v1179, %v1309
        %v1311 = vand.u32 %v713, 4294901760
        %1312 = vmatmul.f32.gmra.mxu0 %v1311
        %v1313 = vpop.f32.mrf.mxu0
        %v1314 = vadd.f32 %v1185, %v1313
        %v1315 = vand.u32 %v716, 4294901760
        %1316 = vmatmul.f32.gmra.mxu0 %v1315
        %v1317 = vpop.f32.mrf.mxu0
        %v1318 = vadd.f32 %v1191, %v1317
        %v1319 = vand.u32 %v719, 4294901760
        %1320 = vmatmul.f32.gmra.mxu0 %v1319
        %v1321 = vpop.f32.mrf.mxu0
        %v1322 = vadd.f32 %v1197, %v1321
        %v1323 = vand.u32 %v722, 4294901760
        %1324 = vmatmul.f32.gmra.mxu0 %v1323
        %v1325 = vpop.f32.mrf.mxu0
        %v1326 = vadd.f32 %v1203, %v1325
        %v1327 = vand.u32 %v725, 4294901760
        %1328 = vmatmul.f32.gmra.mxu0 %v1327
        %v1329 = vpop.f32.mrf.mxu0
        %v1330 = vadd.f32 %v1209, %v1329
        %v1331 = vand.u32 %v728, 4294901760
        %1332 = vmatmul.f32.gmra.mxu0 %v1331
        %v1333 = vpop.f32.mrf.mxu0
        %v1334 = vadd.f32 %v1215, %v1333
        %v1335 = vand.u32 %v731, 4294901760
        %1336 = vmatmul.f32.gmra.mxu0 %v1335
        %v1337 = vpop.f32.mrf.mxu0
        %v1338 = vadd.f32 %v1221, %v1337
        %v1339 = vand.u32 %v734, 4294901760
        %1340 = vmatmul.f32.gmra.mxu0 %v1339
        %v1341 = vpop.f32.mrf.mxu0
        %v1342 = vadd.f32 %v1227, %v1341
        %v1343 = vand.u32 %v737, 4294901760
        %1344 = vmatmul.f32.gmra.mxu0 %v1343
        %v1345 = vpop.f32.mrf.mxu0
        %v1346 = vadd.f32 %v1233, %v1345
        %v1347 = vand.u32 %v740, 4294901760
        %1348 = vmatmul.f32.gmra.mxu0 %v1347
        %v1349 = vpop.f32.mrf.mxu0
        %v1350 = vadd.f32 %v1239, %v1349
        %v1351 = vand.u32 %v743, 4294901760
        %1352 = vmatmul.f32.gmra.mxu0 %v1351
        %v1353 = vpop.f32.mrf.mxu0
        %v1354 = vadd.f32 %v1245, %v1353
        %v1355 = vand.u32 %v746, 4294901760
        %1356 = vmatmul.f32.gmra.mxu0 %v1355
        %v1357 = vpop.f32.mrf.mxu0
        %v1358 = vadd.f32 %v1251, %v1357
        %v1359 = vand.u32 %v749, 4294901760
        %1360 = vmatmul.f32.gmra.mxu0 %v1359
        %v1361 = vpop.f32.mrf.mxu0
        %v1362 = vadd.f32 %v1257, %v1361
        %1363 = vdwg.mxu0
        %1364 = vmatpush.msra.mxu0 0.0
        %1365 = vmatpush.msra.mxu0 0.0
        %1366 = vmatpush.msra.mxu0 0.0
        %1367 = vmatpush.msra.mxu0 0.0
        %1368 = vmatpush.msra.mxu0 0.0
        %1369 = vmatpush.msra.mxu0 0.0
        %1370 = vmatpush.msra.mxu0 0.0
        %1371 = vmatpush.msra.mxu0 0.0
        %v1372 = vand.u32 %v701, 4294901760
        %1373 = vmatpush.msra.mxu0 %v1372
        %v1374 = vand.u32 %v700, 4294901760
        %1375 = vmatpush.msra.mxu0 %v1374
        %v1376 = vand.u32 %v699, 4294901760
        %1377 = vmatpush.msra.mxu0 %v1376
        %v1378 = vand.u32 %v698, 4294901760
        %1379 = vmatpush.msra.mxu0 %v1378
        %v1380 = vand.u32 %v697, 4294901760
        %1381 = vmatpush.msra.mxu0 %v1380
        %v1382 = vand.u32 %v696, 4294901760
        %1383 = vmatpush.msra.mxu0 %v1382
        %v1384 = vand.u32 %v695, 4294901760
        %1385 = vmatpush.msra.mxu0 %v1384
        %v1386 = vand.u32 %v694, 4294901760
        %1387 = vmatpush.msra.mxu0 %v1386
        %v1388 = vand.u32 %v704, 4294901760
        %1389 = vmatmul.f32.gmra.mxu0 %v1388
        %v1390 = vpop.f32.mrf.mxu0
        %v1391 = vadd.f32 %v1302, %v1390
        %v1392 = vand.u32 %v707, 4294901760
        %1393 = vmatmul.f32.gmra.mxu0 %v1392
        %v1394 = vpop.f32.mrf.mxu0
        %v1395 = vadd.f32 %v1306, %v1394
        %v1396 = vand.u32 %v710, 4294901760
        %1397 = vmatmul.f32.gmra.mxu0 %v1396
        %v1398 = vpop.f32.mrf.mxu0
        %v1399 = vadd.f32 %v1310, %v1398
        %v1400 = vand.u32 %v713, 4294901760
        %1401 = vmatmul.f32.gmra.mxu0 %v1400
        %v1402 = vpop.f32.mrf.mxu0
        %v1403 = vadd.f32 %v1314, %v1402
        %v1404 = vand.u32 %v716, 4294901760
        %1405 = vmatmul.f32.gmra.mxu0 %v1404
        %v1406 = vpop.f32.mrf.mxu0
        %v1407 = vadd.f32 %v1318, %v1406
        %v1408 = vand.u32 %v719, 4294901760
        %1409 = vmatmul.f32.gmra.mxu0 %v1408
        %v1410 = vpop.f32.mrf.mxu0
        %v1411 = vadd.f32 %v1322, %v1410
        %v1412 = vand.u32 %v722, 4294901760
        %1413 = vmatmul.f32.gmra.mxu0 %v1412
        %v1414 = vpop.f32.mrf.mxu0
        %v1415 = vadd.f32 %v1326, %v1414
        %v1416 = vand.u32 %v725, 4294901760
        %1417 = vmatmul.f32.gmra.mxu0 %v1416
        %v1418 = vpop.f32.mrf.mxu0
        %v1419 = vadd.f32 %v1330, %v1418
        %v1420 = vand.u32 %v728, 4294901760
        %1421 = vmatmul.f32.gmra.mxu0 %v1420
        %v1422 = vpop.f32.mrf.mxu0
        %v1423 = vadd.f32 %v1334, %v1422
        %v1424 = vand.u32 %v731, 4294901760
        %1425 = vmatmul.f32.gmra.mxu0 %v1424
        %v1426 = vpop.f32.mrf.mxu0
        %v1427 = vadd.f32 %v1338, %v1426
        %v1428 = vand.u32 %v734, 4294901760
        %1429 = vmatmul.f32.gmra.mxu0 %v1428
        %v1430 = vpop.f32.mrf.mxu0
        %v1431 = vadd.f32 %v1342, %v1430
        %v1432 = vand.u32 %v737, 4294901760
        %1433 = vmatmul.f32.gmra.mxu0 %v1432
        %v1434 = vpop.f32.mrf.mxu0
        %v1435 = vadd.f32 %v1346, %v1434
        %v1436 = vand.u32 %v740, 4294901760
        %1437 = vmatmul.f32.gmra.mxu0 %v1436
        %v1438 = vpop.f32.mrf.mxu0
        %v1439 = vadd.f32 %v1350, %v1438
        %v1440 = vand.u32 %v743, 4294901760
        %1441 = vmatmul.f32.gmra.mxu0 %v1440
        %v1442 = vpop.f32.mrf.mxu0
        %v1443 = vadd.f32 %v1354, %v1442
        %v1444 = vand.u32 %v746, 4294901760
        %1445 = vmatmul.f32.gmra.mxu0 %v1444
        %v1446 = vpop.f32.mrf.mxu0
        %v1447 = vadd.f32 %v1358, %v1446
        %v1448 = vand.u32 %v749, 4294901760
        %1449 = vmatmul.f32.gmra.mxu0 %v1448
        %v1450 = vpop.f32.mrf.mxu0
        %v1451 = vadd.f32 %v1362, %v1450
        %1452 = vdwg.mxu0
        %vm1453 = vcmask 130048
        %v1455 = vsel %vm1453, %v145, 0
        %v1458 = vsel %vm1453, %v146, 0
        %v1461 = vsel %vm1453, %v147, 0
        %v1464 = vsel %vm1453, %v148, 0
        %v1467 = vsel %vm1453, %v149, 0
        %v1470 = vsel %vm1453, %v150, 0
        %v1473 = vsel %vm1453, %v151, 0
        %v1476 = vsel %vm1453, %v152, 0
        %v1479 = vsel %vm1453, %v153, 0
        %v1482 = vsel %vm1453, %v154, 0
        %v1485 = vsel %vm1453, %v155, 0
        %v1488 = vsel %vm1453, %v156, 0
        %v1491 = vsel %vm1453, %v157, 0
        %v1494 = vsel %vm1453, %v158, 0
        %v1497 = vsel %vm1453, %v159, 0
        %v1500 = vsel %vm1453, %v160, 0
        %1502 = vmatpush.msra.mxu0 0.0
        %1503 = vmatpush.msra.mxu0 0.0
        %1504 = vmatpush.msra.mxu0 0.0
        %1505 = vmatpush.msra.mxu0 0.0
        %1506 = vmatpush.msra.mxu0 0.0
        %1507 = vmatpush.msra.mxu0 0.0
        %1508 = vmatpush.msra.mxu0 0.0
        %1509 = vmatpush.msra.mxu0 0.0
        %1510 = vmatpush.msra.mxu0 0.0
        %1511 = vmatpush.msra.mxu0 0.0
        %1512 = vmatpush.msra.mxu0 0.0
        %1513 = vmatpush.msra.mxu0 0.0
        %1514 = vmatpush.msra.mxu0 0.0
        %1515 = vmatpush.msra.mxu0 0.0
        %v1516 = vand.u32 %v693, 4294901760
        %1517 = vmatpush.msra.mxu0 %v1516
        %v1518 = vand.u32 %v692, 4294901760
        %1519 = vmatpush.msra.mxu0 %v1518
        %v1520 = vand.u32 %v1455, 4294901760
        %v1521 = vsub.f32 %v1455, %v1520
        %v1522 = vand.u32 %v1521, 4294901760
        %v1523 = vsub.f32 %v1521, %v1522
        %v1524 = vand.u32 %v1523, 4294901760
        %1525 = vmatmul.f32.gmra.mxu0 %v1524
        %v1526 = vpop.f32.mrf.mxu0
        %v1527 = vadd.f32 %v1391, %v1526
        %v1528 = vand.u32 %v1458, 4294901760
        %v1529 = vsub.f32 %v1458, %v1528
        %v1530 = vand.u32 %v1529, 4294901760
        %v1531 = vsub.f32 %v1529, %v1530
        %v1532 = vand.u32 %v1531, 4294901760
        %1533 = vmatmul.f32.gmra.mxu0 %v1532
        %v1534 = vpop.f32.mrf.mxu0
        %v1535 = vadd.f32 %v1395, %v1534
        %v1536 = vand.u32 %v1461, 4294901760
        %v1537 = vsub.f32 %v1461, %v1536
        %v1538 = vand.u32 %v1537, 4294901760
        %v1539 = vsub.f32 %v1537, %v1538
        %v1540 = vand.u32 %v1539, 4294901760
        %1541 = vmatmul.f32.gmra.mxu0 %v1540
        %v1542 = vpop.f32.mrf.mxu0
        %v1543 = vadd.f32 %v1399, %v1542
        %v1544 = vand.u32 %v1464, 4294901760
        %v1545 = vsub.f32 %v1464, %v1544
        %v1546 = vand.u32 %v1545, 4294901760
        %v1547 = vsub.f32 %v1545, %v1546
        %v1548 = vand.u32 %v1547, 4294901760
        %1549 = vmatmul.f32.gmra.mxu0 %v1548
        %v1550 = vpop.f32.mrf.mxu0
        %v1551 = vadd.f32 %v1403, %v1550
        %v1552 = vand.u32 %v1467, 4294901760
        %v1553 = vsub.f32 %v1467, %v1552
        %v1554 = vand.u32 %v1553, 4294901760
        %v1555 = vsub.f32 %v1553, %v1554
        %v1556 = vand.u32 %v1555, 4294901760
        %1557 = vmatmul.f32.gmra.mxu0 %v1556
        %v1558 = vpop.f32.mrf.mxu0
        %v1559 = vadd.f32 %v1407, %v1558
        %v1560 = vand.u32 %v1470, 4294901760
        %v1561 = vsub.f32 %v1470, %v1560
        %v1562 = vand.u32 %v1561, 4294901760
        %v1563 = vsub.f32 %v1561, %v1562
        %v1564 = vand.u32 %v1563, 4294901760
        %1565 = vmatmul.f32.gmra.mxu0 %v1564
        %v1566 = vpop.f32.mrf.mxu0
        %v1567 = vadd.f32 %v1411, %v1566
        %v1568 = vand.u32 %v1473, 4294901760
        %v1569 = vsub.f32 %v1473, %v1568
        %v1570 = vand.u32 %v1569, 4294901760
        %v1571 = vsub.f32 %v1569, %v1570
        %v1572 = vand.u32 %v1571, 4294901760
        %1573 = vmatmul.f32.gmra.mxu0 %v1572
        %v1574 = vpop.f32.mrf.mxu0
        %v1575 = vadd.f32 %v1415, %v1574
        %v1576 = vand.u32 %v1476, 4294901760
        %v1577 = vsub.f32 %v1476, %v1576
        %v1578 = vand.u32 %v1577, 4294901760
        %v1579 = vsub.f32 %v1577, %v1578
        %v1580 = vand.u32 %v1579, 4294901760
        %1581 = vmatmul.f32.gmra.mxu0 %v1580
        %v1582 = vpop.f32.mrf.mxu0
        %v1583 = vadd.f32 %v1419, %v1582
        %v1584 = vand.u32 %v1479, 4294901760
        %v1585 = vsub.f32 %v1479, %v1584
        %v1586 = vand.u32 %v1585, 4294901760
        %v1587 = vsub.f32 %v1585, %v1586
        %v1588 = vand.u32 %v1587, 4294901760
        %1589 = vmatmul.f32.gmra.mxu0 %v1588
        %v1590 = vpop.f32.mrf.mxu0
        %v1591 = vadd.f32 %v1423, %v1590
        %v1592 = vand.u32 %v1482, 4294901760
        %v1593 = vsub.f32 %v1482, %v1592
        %v1594 = vand.u32 %v1593, 4294901760
        %v1595 = vsub.f32 %v1593, %v1594
        %v1596 = vand.u32 %v1595, 4294901760
        %1597 = vmatmul.f32.gmra.mxu0 %v1596
        %v1598 = vpop.f32.mrf.mxu0
        %v1599 = vadd.f32 %v1427, %v1598
        %v1600 = vand.u32 %v1485, 4294901760
        %v1601 = vsub.f32 %v1485, %v1600
        %v1602 = vand.u32 %v1601, 4294901760
        %v1603 = vsub.f32 %v1601, %v1602
        %v1604 = vand.u32 %v1603, 4294901760
        %1605 = vmatmul.f32.gmra.mxu0 %v1604
        %v1606 = vpop.f32.mrf.mxu0
        %v1607 = vadd.f32 %v1431, %v1606
        %v1608 = vand.u32 %v1488, 4294901760
        %v1609 = vsub.f32 %v1488, %v1608
        %v1610 = vand.u32 %v1609, 4294901760
        %v1611 = vsub.f32 %v1609, %v1610
        %v1612 = vand.u32 %v1611, 4294901760
        %1613 = vmatmul.f32.gmra.mxu0 %v1612
        %v1614 = vpop.f32.mrf.mxu0
        %v1615 = vadd.f32 %v1435, %v1614
        %v1616 = vand.u32 %v1491, 4294901760
        %v1617 = vsub.f32 %v1491, %v1616
        %v1618 = vand.u32 %v1617, 4294901760
        %v1619 = vsub.f32 %v1617, %v1618
        %v1620 = vand.u32 %v1619, 4294901760
        %1621 = vmatmul.f32.gmra.mxu0 %v1620
        %v1622 = vpop.f32.mrf.mxu0
        %v1623 = vadd.f32 %v1439, %v1622
        %v1624 = vand.u32 %v1494, 4294901760
        %v1625 = vsub.f32 %v1494, %v1624
        %v1626 = vand.u32 %v1625, 4294901760
        %v1627 = vsub.f32 %v1625, %v1626
        %v1628 = vand.u32 %v1627, 4294901760
        %1629 = vmatmul.f32.gmra.mxu0 %v1628
        %v1630 = vpop.f32.mrf.mxu0
        %v1631 = vadd.f32 %v1443, %v1630
        %v1632 = vand.u32 %v1497, 4294901760
        %v1633 = vsub.f32 %v1497, %v1632
        %v1634 = vand.u32 %v1633, 4294901760
        %v1635 = vsub.f32 %v1633, %v1634
        %v1636 = vand.u32 %v1635, 4294901760
        %1637 = vmatmul.f32.gmra.mxu0 %v1636
        %v1638 = vpop.f32.mrf.mxu0
        %v1639 = vadd.f32 %v1447, %v1638
        %v1640 = vand.u32 %v1500, 4294901760
        %v1641 = vsub.f32 %v1500, %v1640
        %v1642 = vand.u32 %v1641, 4294901760
        %v1643 = vsub.f32 %v1641, %v1642
        %v1644 = vand.u32 %v1643, 4294901760
        %1645 = vmatmul.f32.gmra.mxu0 %v1644
        %v1646 = vpop.f32.mrf.mxu0
        %v1647 = vadd.f32 %v1451, %v1646
        %1648 = vdwg.mxu0
        %1649 = vmatpush.msra.mxu0 0.0
        %1650 = vmatpush.msra.mxu0 0.0
        %1651 = vmatpush.msra.mxu0 0.0
        %1652 = vmatpush.msra.mxu0 0.0
        %1653 = vmatpush.msra.mxu0 0.0
        %1654 = vmatpush.msra.mxu0 0.0
        %1655 = vmatpush.msra.mxu0 0.0
        %1656 = vmatpush.msra.mxu0 0.0
        %1657 = vmatpush.msra.mxu0 0.0
        %1658 = vmatpush.msra.mxu0 0.0
        %1659 = vmatpush.msra.mxu0 0.0
        %1660 = vmatpush.msra.mxu0 0.0
        %1661 = vmatpush.msra.mxu0 0.0
        %1662 = vmatpush.msra.mxu0 0.0
        %v1663 = vand.u32 %v693, 4294901760
        %v1664 = vsub.f32 %v693, %v1663
        %v1665 = vand.u32 %v1664, 4294901760
        %v1666 = vsub.f32 %v1664, %v1665
        %v1667 = vand.u32 %v1666, 4294901760
        %1668 = vmatpush.msra.mxu0 %v1667
        %v1669 = vand.u32 %v692, 4294901760
        %v1670 = vsub.f32 %v692, %v1669
        %v1671 = vand.u32 %v1670, 4294901760
        %v1672 = vsub.f32 %v1670, %v1671
        %v1673 = vand.u32 %v1672, 4294901760
        %1674 = vmatpush.msra.mxu0 %v1673
        %v1675 = vand.u32 %v1455, 4294901760
        %1676 = vmatmul.f32.gmra.mxu0 %v1675
        %v1677 = vpop.f32.mrf.mxu0
        %v1678 = vadd.f32 %v1527, %v1677
        %v1679 = vand.u32 %v1458, 4294901760
        %1680 = vmatmul.f32.gmra.mxu0 %v1679
        %v1681 = vpop.f32.mrf.mxu0
        %v1682 = vadd.f32 %v1535, %v1681
        %v1683 = vand.u32 %v1461, 4294901760
        %1684 = vmatmul.f32.gmra.mxu0 %v1683
        %v1685 = vpop.f32.mrf.mxu0
        %v1686 = vadd.f32 %v1543, %v1685
        %v1687 = vand.u32 %v1464, 4294901760
        %1688 = vmatmul.f32.gmra.mxu0 %v1687
        %v1689 = vpop.f32.mrf.mxu0
        %v1690 = vadd.f32 %v1551, %v1689
        %v1691 = vand.u32 %v1467, 4294901760
        %1692 = vmatmul.f32.gmra.mxu0 %v1691
        %v1693 = vpop.f32.mrf.mxu0
        %v1694 = vadd.f32 %v1559, %v1693
        %v1695 = vand.u32 %v1470, 4294901760
        %1696 = vmatmul.f32.gmra.mxu0 %v1695
        %v1697 = vpop.f32.mrf.mxu0
        %v1698 = vadd.f32 %v1567, %v1697
        %v1699 = vand.u32 %v1473, 4294901760
        %1700 = vmatmul.f32.gmra.mxu0 %v1699
        %v1701 = vpop.f32.mrf.mxu0
        %v1702 = vadd.f32 %v1575, %v1701
        %v1703 = vand.u32 %v1476, 4294901760
        %1704 = vmatmul.f32.gmra.mxu0 %v1703
        %v1705 = vpop.f32.mrf.mxu0
        %v1706 = vadd.f32 %v1583, %v1705
        %v1707 = vand.u32 %v1479, 4294901760
        %1708 = vmatmul.f32.gmra.mxu0 %v1707
        %v1709 = vpop.f32.mrf.mxu0
        %v1710 = vadd.f32 %v1591, %v1709
        %v1711 = vand.u32 %v1482, 4294901760
        %1712 = vmatmul.f32.gmra.mxu0 %v1711
        %v1713 = vpop.f32.mrf.mxu0
        %v1714 = vadd.f32 %v1599, %v1713
        %v1715 = vand.u32 %v1485, 4294901760
        %1716 = vmatmul.f32.gmra.mxu0 %v1715
        %v1717 = vpop.f32.mrf.mxu0
        %v1718 = vadd.f32 %v1607, %v1717
        %v1719 = vand.u32 %v1488, 4294901760
        %1720 = vmatmul.f32.gmra.mxu0 %v1719
        %v1721 = vpop.f32.mrf.mxu0
        %v1722 = vadd.f32 %v1615, %v1721
        %v1723 = vand.u32 %v1491, 4294901760
        %1724 = vmatmul.f32.gmra.mxu0 %v1723
        %v1725 = vpop.f32.mrf.mxu0
        %v1726 = vadd.f32 %v1623, %v1725
        %v1727 = vand.u32 %v1494, 4294901760
        %1728 = vmatmul.f32.gmra.mxu0 %v1727
        %v1729 = vpop.f32.mrf.mxu0
        %v1730 = vadd.f32 %v1631, %v1729
        %v1731 = vand.u32 %v1497, 4294901760
        %1732 = vmatmul.f32.gmra.mxu0 %v1731
        %v1733 = vpop.f32.mrf.mxu0
        %v1734 = vadd.f32 %v1639, %v1733
        %v1735 = vand.u32 %v1500, 4294901760
        %1736 = vmatmul.f32.gmra.mxu0 %v1735
        %v1737 = vpop.f32.mrf.mxu0
        %v1738 = vadd.f32 %v1647, %v1737
        %1739 = vdwg.mxu0
        %1740 = vmatpush.msra.mxu0 0.0
        %1741 = vmatpush.msra.mxu0 0.0
        %1742 = vmatpush.msra.mxu0 0.0
        %1743 = vmatpush.msra.mxu0 0.0
        %1744 = vmatpush.msra.mxu0 0.0
        %1745 = vmatpush.msra.mxu0 0.0
        %1746 = vmatpush.msra.mxu0 0.0
        %1747 = vmatpush.msra.mxu0 0.0
        %1748 = vmatpush.msra.mxu0 0.0
        %1749 = vmatpush.msra.mxu0 0.0
        %1750 = vmatpush.msra.mxu0 0.0
        %1751 = vmatpush.msra.mxu0 0.0
        %1752 = vmatpush.msra.mxu0 0.0
        %1753 = vmatpush.msra.mxu0 0.0
        %v1754 = vand.u32 %v693, 4294901760
        %v1755 = vsub.f32 %v693, %v1754
        %1756 = vmatpush.msra.mxu0 %v1755
        %v1757 = vand.u32 %v692, 4294901760
        %v1758 = vsub.f32 %v692, %v1757
        %1759 = vmatpush.msra.mxu0 %v1758
        %v1760 = vand.u32 %v1455, 4294901760
        %v1761 = vsub.f32 %v1455, %v1760
        %1762 = vmatmul.f32.gmra.mxu0 %v1761
        %v1763 = vpop.f32.mrf.mxu0
        %v1764 = vadd.f32 %v1678, %v1763
        %v1765 = vand.u32 %v1458, 4294901760
        %v1766 = vsub.f32 %v1458, %v1765
        %1767 = vmatmul.f32.gmra.mxu0 %v1766
        %v1768 = vpop.f32.mrf.mxu0
        %v1769 = vadd.f32 %v1682, %v1768
        %v1770 = vand.u32 %v1461, 4294901760
        %v1771 = vsub.f32 %v1461, %v1770
        %1772 = vmatmul.f32.gmra.mxu0 %v1771
        %v1773 = vpop.f32.mrf.mxu0
        %v1774 = vadd.f32 %v1686, %v1773
        %v1775 = vand.u32 %v1464, 4294901760
        %v1776 = vsub.f32 %v1464, %v1775
        %1777 = vmatmul.f32.gmra.mxu0 %v1776
        %v1778 = vpop.f32.mrf.mxu0
        %v1779 = vadd.f32 %v1690, %v1778
        %v1780 = vand.u32 %v1467, 4294901760
        %v1781 = vsub.f32 %v1467, %v1780
        %1782 = vmatmul.f32.gmra.mxu0 %v1781
        %v1783 = vpop.f32.mrf.mxu0
        %v1784 = vadd.f32 %v1694, %v1783
        %v1785 = vand.u32 %v1470, 4294901760
        %v1786 = vsub.f32 %v1470, %v1785
        %1787 = vmatmul.f32.gmra.mxu0 %v1786
        %v1788 = vpop.f32.mrf.mxu0
        %v1789 = vadd.f32 %v1698, %v1788
        %v1790 = vand.u32 %v1473, 4294901760
        %v1791 = vsub.f32 %v1473, %v1790
        %1792 = vmatmul.f32.gmra.mxu0 %v1791
        %v1793 = vpop.f32.mrf.mxu0
        %v1794 = vadd.f32 %v1702, %v1793
        %v1795 = vand.u32 %v1476, 4294901760
        %v1796 = vsub.f32 %v1476, %v1795
        %1797 = vmatmul.f32.gmra.mxu0 %v1796
        %v1798 = vpop.f32.mrf.mxu0
        %v1799 = vadd.f32 %v1706, %v1798
        %v1800 = vand.u32 %v1479, 4294901760
        %v1801 = vsub.f32 %v1479, %v1800
        %1802 = vmatmul.f32.gmra.mxu0 %v1801
        %v1803 = vpop.f32.mrf.mxu0
        %v1804 = vadd.f32 %v1710, %v1803
        %v1805 = vand.u32 %v1482, 4294901760
        %v1806 = vsub.f32 %v1482, %v1805
        %1807 = vmatmul.f32.gmra.mxu0 %v1806
        %v1808 = vpop.f32.mrf.mxu0
        %v1809 = vadd.f32 %v1714, %v1808
        %v1810 = vand.u32 %v1485, 4294901760
        %v1811 = vsub.f32 %v1485, %v1810
        %1812 = vmatmul.f32.gmra.mxu0 %v1811
        %v1813 = vpop.f32.mrf.mxu0
        %v1814 = vadd.f32 %v1718, %v1813
        %v1815 = vand.u32 %v1488, 4294901760
        %v1816 = vsub.f32 %v1488, %v1815
        %1817 = vmatmul.f32.gmra.mxu0 %v1816
        %v1818 = vpop.f32.mrf.mxu0
        %v1819 = vadd.f32 %v1722, %v1818
        %v1820 = vand.u32 %v1491, 4294901760
        %v1821 = vsub.f32 %v1491, %v1820
        %1822 = vmatmul.f32.gmra.mxu0 %v1821
        %v1823 = vpop.f32.mrf.mxu0
        %v1824 = vadd.f32 %v1726, %v1823
        %v1825 = vand.u32 %v1494, 4294901760
        %v1826 = vsub.f32 %v1494, %v1825
        %1827 = vmatmul.f32.gmra.mxu0 %v1826
        %v1828 = vpop.f32.mrf.mxu0
        %v1829 = vadd.f32 %v1730, %v1828
        %v1830 = vand.u32 %v1497, 4294901760
        %v1831 = vsub.f32 %v1497, %v1830
        %1832 = vmatmul.f32.gmra.mxu0 %v1831
        %v1833 = vpop.f32.mrf.mxu0
        %v1834 = vadd.f32 %v1734, %v1833
        %v1835 = vand.u32 %v1500, 4294901760
        %v1836 = vsub.f32 %v1500, %v1835
        %1837 = vmatmul.f32.gmra.mxu0 %v1836
        %v1838 = vpop.f32.mrf.mxu0
        %v1839 = vadd.f32 %v1738, %v1838
        %1840 = vdwg.mxu0
        %1841 = vmatpush.msra.mxu0 0.0
        %1842 = vmatpush.msra.mxu0 0.0
        %1843 = vmatpush.msra.mxu0 0.0
        %1844 = vmatpush.msra.mxu0 0.0
        %1845 = vmatpush.msra.mxu0 0.0
        %1846 = vmatpush.msra.mxu0 0.0
        %1847 = vmatpush.msra.mxu0 0.0
        %1848 = vmatpush.msra.mxu0 0.0
        %1849 = vmatpush.msra.mxu0 0.0
        %1850 = vmatpush.msra.mxu0 0.0
        %1851 = vmatpush.msra.mxu0 0.0
        %1852 = vmatpush.msra.mxu0 0.0
        %1853 = vmatpush.msra.mxu0 0.0
        %1854 = vmatpush.msra.mxu0 0.0
        %v1855 = vand.u32 %v693, 4294901760
        %1856 = vmatpush.msra.mxu0 %v1855
        %v1857 = vand.u32 %v692, 4294901760
        %1858 = vmatpush.msra.mxu0 %v1857
        %v1859 = vand.u32 %v1455, 4294901760
        %v1860 = vsub.f32 %v1455, %v1859
        %v1861 = vand.u32 %v1860, 4294901760
        %1862 = vmatmul.f32.gmra.mxu0 %v1861
        %v1863 = vpop.f32.mrf.mxu0
        %v1864 = vadd.f32 %v1764, %v1863
        %v1865 = vand.u32 %v1458, 4294901760
        %v1866 = vsub.f32 %v1458, %v1865
        %v1867 = vand.u32 %v1866, 4294901760
        %1868 = vmatmul.f32.gmra.mxu0 %v1867
        %v1869 = vpop.f32.mrf.mxu0
        %v1870 = vadd.f32 %v1769, %v1869
        %v1871 = vand.u32 %v1461, 4294901760
        %v1872 = vsub.f32 %v1461, %v1871
        %v1873 = vand.u32 %v1872, 4294901760
        %1874 = vmatmul.f32.gmra.mxu0 %v1873
        %v1875 = vpop.f32.mrf.mxu0
        %v1876 = vadd.f32 %v1774, %v1875
        %v1877 = vand.u32 %v1464, 4294901760
        %v1878 = vsub.f32 %v1464, %v1877
        %v1879 = vand.u32 %v1878, 4294901760
        %1880 = vmatmul.f32.gmra.mxu0 %v1879
        %v1881 = vpop.f32.mrf.mxu0
        %v1882 = vadd.f32 %v1779, %v1881
        %v1883 = vand.u32 %v1467, 4294901760
        %v1884 = vsub.f32 %v1467, %v1883
        %v1885 = vand.u32 %v1884, 4294901760
        %1886 = vmatmul.f32.gmra.mxu0 %v1885
        %v1887 = vpop.f32.mrf.mxu0
        %v1888 = vadd.f32 %v1784, %v1887
        %v1889 = vand.u32 %v1470, 4294901760
        %v1890 = vsub.f32 %v1470, %v1889
        %v1891 = vand.u32 %v1890, 4294901760
        %1892 = vmatmul.f32.gmra.mxu0 %v1891
        %v1893 = vpop.f32.mrf.mxu0
        %v1894 = vadd.f32 %v1789, %v1893
        %v1895 = vand.u32 %v1473, 4294901760
        %v1896 = vsub.f32 %v1473, %v1895
        %v1897 = vand.u32 %v1896, 4294901760
        %1898 = vmatmul.f32.gmra.mxu0 %v1897
        %v1899 = vpop.f32.mrf.mxu0
        %v1900 = vadd.f32 %v1794, %v1899
        %v1901 = vand.u32 %v1476, 4294901760
        %v1902 = vsub.f32 %v1476, %v1901
        %v1903 = vand.u32 %v1902, 4294901760
        %1904 = vmatmul.f32.gmra.mxu0 %v1903
        %v1905 = vpop.f32.mrf.mxu0
        %v1906 = vadd.f32 %v1799, %v1905
        %v1907 = vand.u32 %v1479, 4294901760
        %v1908 = vsub.f32 %v1479, %v1907
        %v1909 = vand.u32 %v1908, 4294901760
        %1910 = vmatmul.f32.gmra.mxu0 %v1909
        %v1911 = vpop.f32.mrf.mxu0
        %v1912 = vadd.f32 %v1804, %v1911
        %v1913 = vand.u32 %v1482, 4294901760
        %v1914 = vsub.f32 %v1482, %v1913
        %v1915 = vand.u32 %v1914, 4294901760
        %1916 = vmatmul.f32.gmra.mxu0 %v1915
        %v1917 = vpop.f32.mrf.mxu0
        %v1918 = vadd.f32 %v1809, %v1917
        %v1919 = vand.u32 %v1485, 4294901760
        %v1920 = vsub.f32 %v1485, %v1919
        %v1921 = vand.u32 %v1920, 4294901760
        %1922 = vmatmul.f32.gmra.mxu0 %v1921
        %v1923 = vpop.f32.mrf.mxu0
        %v1924 = vadd.f32 %v1814, %v1923
        %v1925 = vand.u32 %v1488, 4294901760
        %v1926 = vsub.f32 %v1488, %v1925
        %v1927 = vand.u32 %v1926, 4294901760
        %1928 = vmatmul.f32.gmra.mxu0 %v1927
        %v1929 = vpop.f32.mrf.mxu0
        %v1930 = vadd.f32 %v1819, %v1929
        %v1931 = vand.u32 %v1491, 4294901760
        %v1932 = vsub.f32 %v1491, %v1931
        %v1933 = vand.u32 %v1932, 4294901760
        %1934 = vmatmul.f32.gmra.mxu0 %v1933
        %v1935 = vpop.f32.mrf.mxu0
        %v1936 = vadd.f32 %v1824, %v1935
        %v1937 = vand.u32 %v1494, 4294901760
        %v1938 = vsub.f32 %v1494, %v1937
        %v1939 = vand.u32 %v1938, 4294901760
        %1940 = vmatmul.f32.gmra.mxu0 %v1939
        %v1941 = vpop.f32.mrf.mxu0
        %v1942 = vadd.f32 %v1829, %v1941
        %v1943 = vand.u32 %v1497, 4294901760
        %v1944 = vsub.f32 %v1497, %v1943
        %v1945 = vand.u32 %v1944, 4294901760
        %1946 = vmatmul.f32.gmra.mxu0 %v1945
        %v1947 = vpop.f32.mrf.mxu0
        %v1948 = vadd.f32 %v1834, %v1947
        %v1949 = vand.u32 %v1500, 4294901760
        %v1950 = vsub.f32 %v1500, %v1949
        %v1951 = vand.u32 %v1950, 4294901760
        %1952 = vmatmul.f32.gmra.mxu0 %v1951
        %v1953 = vpop.f32.mrf.mxu0
        %v1954 = vadd.f32 %v1839, %v1953
        %1955 = vdwg.mxu0
        %1956 = vmatpush.msra.mxu0 0.0
        %1957 = vmatpush.msra.mxu0 0.0
        %1958 = vmatpush.msra.mxu0 0.0
        %1959 = vmatpush.msra.mxu0 0.0
        %1960 = vmatpush.msra.mxu0 0.0
        %1961 = vmatpush.msra.mxu0 0.0
        %1962 = vmatpush.msra.mxu0 0.0
        %1963 = vmatpush.msra.mxu0 0.0
        %1964 = vmatpush.msra.mxu0 0.0
        %1965 = vmatpush.msra.mxu0 0.0
        %1966 = vmatpush.msra.mxu0 0.0
        %1967 = vmatpush.msra.mxu0 0.0
        %1968 = vmatpush.msra.mxu0 0.0
        %1969 = vmatpush.msra.mxu0 0.0
        %v1970 = vand.u32 %v693, 4294901760
        %v1971 = vsub.f32 %v693, %v1970
        %v1972 = vand.u32 %v1971, 4294901760
        %1973 = vmatpush.msra.mxu0 %v1972
        %v1974 = vand.u32 %v692, 4294901760
        %v1975 = vsub.f32 %v692, %v1974
        %v1976 = vand.u32 %v1975, 4294901760
        %1977 = vmatpush.msra.mxu0 %v1976
        %v1978 = vand.u32 %v1455, 4294901760
        %1979 = vmatmul.f32.gmra.mxu0 %v1978
        %v1980 = vpop.f32.mrf.mxu0
        %v1981 = vadd.f32 %v1864, %v1980
        %v1982 = vand.u32 %v1458, 4294901760
        %1983 = vmatmul.f32.gmra.mxu0 %v1982
        %v1984 = vpop.f32.mrf.mxu0
        %v1985 = vadd.f32 %v1870, %v1984
        %v1986 = vand.u32 %v1461, 4294901760
        %1987 = vmatmul.f32.gmra.mxu0 %v1986
        %v1988 = vpop.f32.mrf.mxu0
        %v1989 = vadd.f32 %v1876, %v1988
        %v1990 = vand.u32 %v1464, 4294901760
        %1991 = vmatmul.f32.gmra.mxu0 %v1990
        %v1992 = vpop.f32.mrf.mxu0
        %v1993 = vadd.f32 %v1882, %v1992
        %v1994 = vand.u32 %v1467, 4294901760
        %1995 = vmatmul.f32.gmra.mxu0 %v1994
        %v1996 = vpop.f32.mrf.mxu0
        %v1997 = vadd.f32 %v1888, %v1996
        %v1998 = vand.u32 %v1470, 4294901760
        %1999 = vmatmul.f32.gmra.mxu0 %v1998
        %v2000 = vpop.f32.mrf.mxu0
        %v2001 = vadd.f32 %v1894, %v2000
        %v2002 = vand.u32 %v1473, 4294901760
        %2003 = vmatmul.f32.gmra.mxu0 %v2002
        %v2004 = vpop.f32.mrf.mxu0
        %v2005 = vadd.f32 %v1900, %v2004
        %v2006 = vand.u32 %v1476, 4294901760
        %2007 = vmatmul.f32.gmra.mxu0 %v2006
        %v2008 = vpop.f32.mrf.mxu0
        %v2009 = vadd.f32 %v1906, %v2008
        %v2010 = vand.u32 %v1479, 4294901760
        %2011 = vmatmul.f32.gmra.mxu0 %v2010
        %v2012 = vpop.f32.mrf.mxu0
        %v2013 = vadd.f32 %v1912, %v2012
        %v2014 = vand.u32 %v1482, 4294901760
        %2015 = vmatmul.f32.gmra.mxu0 %v2014
        %v2016 = vpop.f32.mrf.mxu0
        %v2017 = vadd.f32 %v1918, %v2016
        %v2018 = vand.u32 %v1485, 4294901760
        %2019 = vmatmul.f32.gmra.mxu0 %v2018
        %v2020 = vpop.f32.mrf.mxu0
        %v2021 = vadd.f32 %v1924, %v2020
        %v2022 = vand.u32 %v1488, 4294901760
        %2023 = vmatmul.f32.gmra.mxu0 %v2022
        %v2024 = vpop.f32.mrf.mxu0
        %v2025 = vadd.f32 %v1930, %v2024
        %v2026 = vand.u32 %v1491, 4294901760
        %2027 = vmatmul.f32.gmra.mxu0 %v2026
        %v2028 = vpop.f32.mrf.mxu0
        %v2029 = vadd.f32 %v1936, %v2028
        %v2030 = vand.u32 %v1494, 4294901760
        %2031 = vmatmul.f32.gmra.mxu0 %v2030
        %v2032 = vpop.f32.mrf.mxu0
        %v2033 = vadd.f32 %v1942, %v2032
        %v2034 = vand.u32 %v1497, 4294901760
        %2035 = vmatmul.f32.gmra.mxu0 %v2034
        %v2036 = vpop.f32.mrf.mxu0
        %v2037 = vadd.f32 %v1948, %v2036
        %v2038 = vand.u32 %v1500, 4294901760
        %2039 = vmatmul.f32.gmra.mxu0 %v2038
        %v2040 = vpop.f32.mrf.mxu0
        %v2041 = vadd.f32 %v1954, %v2040
        %2042 = vdwg.mxu0
        %2043 = vmatpush.msra.mxu0 0.0
        %2044 = vmatpush.msra.mxu0 0.0
        %2045 = vmatpush.msra.mxu0 0.0
        %2046 = vmatpush.msra.mxu0 0.0
        %2047 = vmatpush.msra.mxu0 0.0
        %2048 = vmatpush.msra.mxu0 0.0
        %2049 = vmatpush.msra.mxu0 0.0
        %2050 = vmatpush.msra.mxu0 0.0
        %2051 = vmatpush.msra.mxu0 0.0
        %2052 = vmatpush.msra.mxu0 0.0
        %2053 = vmatpush.msra.mxu0 0.0
        %2054 = vmatpush.msra.mxu0 0.0
        %2055 = vmatpush.msra.mxu0 0.0
        %2056 = vmatpush.msra.mxu0 0.0
        %v2057 = vand.u32 %v693, 4294901760
        %2058 = vmatpush.msra.mxu0 %v2057
        %v2059 = vand.u32 %v692, 4294901760
        %2060 = vmatpush.msra.mxu0 %v2059
        %v2061 = vand.u32 %v1455, 4294901760
        %2062 = vmatmul.f32.gmra.mxu0 %v2061
        %v2063 = vpop.f32.mrf.mxu0
        %v2064 = vadd.f32 %v1981, %v2063
        %v2065 = vand.u32 %v1458, 4294901760
        %2066 = vmatmul.f32.gmra.mxu0 %v2065
        %v2067 = vpop.f32.mrf.mxu0
        %v2068 = vadd.f32 %v1985, %v2067
        %v2069 = vand.u32 %v1461, 4294901760
        %2070 = vmatmul.f32.gmra.mxu0 %v2069
        %v2071 = vpop.f32.mrf.mxu0
        %v2072 = vadd.f32 %v1989, %v2071
        %v2073 = vand.u32 %v1464, 4294901760
        %2074 = vmatmul.f32.gmra.mxu0 %v2073
        %v2075 = vpop.f32.mrf.mxu0
        %v2076 = vadd.f32 %v1993, %v2075
        %v2077 = vand.u32 %v1467, 4294901760
        %2078 = vmatmul.f32.gmra.mxu0 %v2077
        %v2079 = vpop.f32.mrf.mxu0
        %v2080 = vadd.f32 %v1997, %v2079
        %v2081 = vand.u32 %v1470, 4294901760
        %2082 = vmatmul.f32.gmra.mxu0 %v2081
        %v2083 = vpop.f32.mrf.mxu0
        %v2084 = vadd.f32 %v2001, %v2083
        %v2085 = vand.u32 %v1473, 4294901760
        %2086 = vmatmul.f32.gmra.mxu0 %v2085
        %v2087 = vpop.f32.mrf.mxu0
        %v2088 = vadd.f32 %v2005, %v2087
        %v2089 = vand.u32 %v1476, 4294901760
        %2090 = vmatmul.f32.gmra.mxu0 %v2089
        %v2091 = vpop.f32.mrf.mxu0
        %v2092 = vadd.f32 %v2009, %v2091
        %v2093 = vand.u32 %v1479, 4294901760
        %2094 = vmatmul.f32.gmra.mxu0 %v2093
        %v2095 = vpop.f32.mrf.mxu0
        %v2096 = vadd.f32 %v2013, %v2095
        %v2097 = vand.u32 %v1482, 4294901760
        %2098 = vmatmul.f32.gmra.mxu0 %v2097
        %v2099 = vpop.f32.mrf.mxu0
        %v2100 = vadd.f32 %v2017, %v2099
        %v2101 = vand.u32 %v1485, 4294901760
        %2102 = vmatmul.f32.gmra.mxu0 %v2101
        %v2103 = vpop.f32.mrf.mxu0
        %v2104 = vadd.f32 %v2021, %v2103
        %v2105 = vand.u32 %v1488, 4294901760
        %2106 = vmatmul.f32.gmra.mxu0 %v2105
        %v2107 = vpop.f32.mrf.mxu0
        %v2108 = vadd.f32 %v2025, %v2107
        %v2109 = vand.u32 %v1491, 4294901760
        %2110 = vmatmul.f32.gmra.mxu0 %v2109
        %v2111 = vpop.f32.mrf.mxu0
        %v2112 = vadd.f32 %v2029, %v2111
        %v2113 = vand.u32 %v1494, 4294901760
        %2114 = vmatmul.f32.gmra.mxu0 %v2113
        %v2115 = vpop.f32.mrf.mxu0
        %v2116 = vadd.f32 %v2033, %v2115
        %v2117 = vand.u32 %v1497, 4294901760
        %2118 = vmatmul.f32.gmra.mxu0 %v2117
        %v2119 = vpop.f32.mrf.mxu0
        %v2120 = vadd.f32 %v2037, %v2119
        %v2121 = vand.u32 %v1500, 4294901760
        %2122 = vmatmul.f32.gmra.mxu0 %v2121
        %v2123 = vpop.f32.mrf.mxu0
        %v2124 = vadd.f32 %v2041, %v2123
        %2125 = vdwg.mxu0
        %2126 = vst [vmem:[%s137] sm:$0xff] %v2064
        %2127 = vst [vmem:[%s137 + $0x8] sm:$0xff] %v2068
        %2128 = vst [vmem:[%s137 + $0x10] sm:$0xff] %v2072
        %2129 = vst [vmem:[%s137 + $0x18] sm:$0xff] %v2076
        %2130 = vst [vmem:[%s137 + $0x20] sm:$0xff] %v2080
        %2131 = vst [vmem:[%s137 + $0x28] sm:$0xff] %v2084
        %2132 = vst [vmem:[%s137 + $0x30] sm:$0xff] %v2088
        %2133 = vst [vmem:[%s137 + $0x38] sm:$0xff] %v2092
        %2134 = vst [vmem:[%s137 + $0x40] sm:$0xff] %v2096
        %2135 = vst [vmem:[%s137 + $0x48] sm:$0xff] %v2100
        %2136 = vst [vmem:[%s137 + $0x50] sm:$0xff] %v2104
        %2137 = vst [vmem:[%s137 + $0x58] sm:$0xff] %v2108
        %2138 = vst [vmem:[%s137 + $0x60] sm:$0xff] %v2112
        %2139 = vst [vmem:[%s137 + $0x68] sm:$0xff] %v2116
        %2140 = vst [vmem:[%s137 + $0x70] sm:$0xff] %v2120
        %2141 = vst [vmem:[%s137 + $0x78] sm:$0xff] %v2124
        %s2142 = sand.u32 %s71, 1
        %s2143 = scalar_lea.sflag [#allocation3], %s2142
        %s2144 = sand.u32 %s71, 1
        %s2145 = smul.addr %s2144, 128
        %s2146 = scalar_lea.vmem [#allocation2], %s2145
        // Predicated region
        $region29: #{tpu_custom_call.1} parent=27 // pred_check
          %p2147 = pneg %p81
        $region30: #{tpu_custom_call.1} parent=27 // pred_check_branch
          %2149 = sbr.rel (%p2147) target = $region32
        $region31: #{tpu_custom_call.1} parent=27 // pred_region
          %s2150 = smul.u32 16, %s16
          %2152 = vsyncadd %s2143, 0
          %s2153 = smul.addr %s2150, 8
          %s2154 = scalar_lea.hbm %s2, %s2153
          %s2155 = sshll.u32 %s2146, 4
          %s2156 = int_to_ptr.vmem [resolvable:$true] %s2155
          %s2157 = sshll.u32 %s2154, 4
          %s2158 = int_to_ptr.hbm [resolvable:$true] %s2157
          %2163 = dma.vmem_to_hbm [thread:$0]  %s2156, 2048, %s2158, %s2143, 128, 128, 8
        $region32: #{tpu_custom_call.1} parent=27 // pred_fallthru
          _
      $region28: #{tpu_custom_call.1} parent=5 // pred_fallthru
        _
      %p2164 = scmp.le.s32.totalorder 2, %s11
      // Predicated region
      $region33: #{tpu_custom_call.1} parent=5 // pred_check
        %p2165 = pneg %p2164
      $region34: #{tpu_custom_call.1} parent=5 // pred_check_branch
        %2167 = sbr.rel (%p2165) target = $region36
      $region35: #{tpu_custom_call.1} parent=5 // pred_region
        %s2168 = ssub.s32 %s11, 2
        // Predicated region
        $region37: #{tpu_custom_call.1} parent=35 // pred_check
          %p2169 = pneg %p87
        $region38: #{tpu_custom_call.1} parent=35 // pred_check_branch
          %2171 = sbr.rel (%p2169) target = $region40
        $region39: #{tpu_custom_call.1} parent=35 // pred_region
          %s2172 = sand.u32 %s72, 1
          %s2173 = scalar_lea.sflag [#allocation3], %s2172
          %s2174 = sand.u32 %s72, 1
          %s2175 = smul.addr %s2174, 128
          %s2176 = scalar_lea.vmem [#allocation2], %s2175
          %2178 = dma.done %s2173, 2048
        $region40: #{tpu_custom_call.1} parent=35 // pred_fallthru
          _
      $region36: #{tpu_custom_call.1} parent=5 // pred_fallthru
        _
    $region6: #{tpu_custom_call.1} parent=1 // loop_footer
      %s15 = sadd.s32 1, %s11
    $region7: #{tpu_custom_call.1} parent=1 // loop_footer_branch
      %10 = sbr.rel target = $region3
    $region8: #{tpu_custom_call.1} parent=1 // loop_exit
      _
    %2179 = vsyncpa [#allocation3], 1
    %s2180 = scalar_lea.sflag [#allocation3], 1
    %2181 = vsyncpa %s2180, 1

</llo_original>
